<compile_context>
chip_gen: v7x
topology: tpu7x:2x2x1
jax: 0.10.0
libtpu: 0.0.40
codegen_flags: <defaults>
</compile_context>

<pallas_src>
import functools

import jax
import jax.numpy as jnp
from jax.experimental import pallas as pl
from jax.experimental.pallas import tpu as pltpu


# ----------------------------------------------------------------------------
# Kernel 1: bf16 matmul + bias (synthetic student "model" hot path)
#   hidden = x_emb @ W + b
#   x_emb: [M, K] bf16, W: [K, N] bf16, b: [1, N] f32, hidden: [M, N] bf16
# ----------------------------------------------------------------------------
def _linear_single_k_kernel(x_ref, w_ref, b_ref, o_ref):
    # Whole K reduction in one grid step: no accumulator scratch, no init/finalize
    # phases; bias is fused into the single store.
    o_ref[...] = (
        jnp.dot(x_ref[...], w_ref[...], preferred_element_type=jnp.float32)
        + b_ref[...]
    ).astype(o_ref.dtype)


def _linear_tiled_kernel(x_ref, w_ref, b_ref, o_ref, acc_ref):
    # General path for shapes whose K does not fit a single tile.
    @pl.when(pl.program_id(2) == 0)
    def _init():
        acc_ref[...] = jnp.zeros_like(acc_ref)

    acc_ref[...] += jnp.dot(
        x_ref[...], w_ref[...], preferred_element_type=jnp.float32
    )

    @pl.when(pl.program_id(2) == pl.num_programs(2) - 1)
    def _finalize():
        o_ref[...] = (acc_ref[...] + b_ref[...]).astype(o_ref.dtype)


def linear_pallas(x, w, b, *, tm=512, tn=512, tk=1024, out_dtype=jnp.bfloat16):
    """hidden = x @ w + b with bf16 operands, f32 MXU accumulation, bf16 output."""
    m, k = x.shape
    n = w.shape[1]
    tm, tn, tk = min(tm, m), min(tn, n), min(tk, k)
    assert m % tm == 0 and n % tn == 0 and k % tk == 0, (m, n, k, tm, tn, tk)

    cost = pl.CostEstimate(
        flops=2 * m * n * k,
        transcendentals=0,
        bytes_accessed=(m * k * x.dtype.itemsize
                        + k * n * w.dtype.itemsize
                        + n * b.dtype.itemsize
                        + m * n * jnp.dtype(out_dtype).itemsize),
    )

    if tk == k:
        # Single K step: demo shapes collapse to grid (1, 1). At real shapes the
        # remaining (M, N) axes stay "parallel" so v7x's two TensorCores both engage.
        return pl.pallas_call(
            _linear_single_k_kernel,
            out_shape=jax.ShapeDtypeStruct((m, n), out_dtype),
            grid=(m // tm, n // tn),
            in_specs=[
                pl.BlockSpec((tm, tk), lambda i, j: (i, 0)),
                pl.BlockSpec((tk, tn), lambda i, j: (0, j)),
                pl.BlockSpec((1, tn), lambda i, j: (0, j)),
            ],
            out_specs=pl.BlockSpec((tm, tn), lambda i, j: (i, j)),
            compiler_params=pltpu.CompilerParams(
                dimension_semantics=("parallel", "parallel"),
                vmem_limit_bytes=32 * 1024 * 1024,
            ),
            cost_estimate=cost,
        )(x, w, b)

    # Tiled K-reduction path. tm=tn=512, tk=1024 bf16 double-buffered tiles plus
    # the f32 accumulator stay well under v7x's 32 MiB scoped VMEM.
    return pl.pallas_call(
        _linear_tiled_kernel,
        out_shape=jax.ShapeDtypeStruct((m, n), out_dtype),
        grid=(m // tm, n // tn, k // tk),
        in_specs=[
            pl.BlockSpec((tm, tk), lambda i, j, kk: (i, kk)),
            pl.BlockSpec((tk, tn), lambda i, j, kk: (kk, j)),
            pl.BlockSpec((1, tn), lambda i, j, kk: (0, j)),
        ],
        out_specs=pl.BlockSpec((tm, tn), lambda i, j, kk: (i, j)),
        scratch_shapes=[pltpu.VMEM((tm, tn), jnp.float32)],
        compiler_params=pltpu.CompilerParams(
            dimension_semantics=("parallel", "parallel", "arbitrary"),
            vmem_limit_bytes=32 * 1024 * 1024,
        ),
        cost_estimate=cost,
    )(x, w, b)


# ----------------------------------------------------------------------------
# Kernel 2: distillation KL head (single dense [B, H] block)
#   - student log_softmax(emb / T), teacher softmax(teacher / T)
#   - KL divergence, reduction='batchmean', scaled by T^2 (scalar out via SMEM)
#   Temperature is a compile-time constant: inv_temp = 1/T, loss_scale = T^2/B.
# ----------------------------------------------------------------------------
def _kl_head_kernel(emb_ref, teacher_ref, loss_ref, *, inv_temp, loss_scale):
    emb = emb_ref[...].astype(jnp.float32)       # [B, H] (bf16 -> f32)
    teacher = teacher_ref[...]                   # [B, H] f32

    # student log_softmax(emb / T)  (divide folded into compile-time inv_temp mul)
    s_logits = emb * inv_temp
    s_max = jnp.max(s_logits, axis=-1, keepdims=True)
    s_shift = s_logits - s_max
    s_lse = jnp.log(jnp.sum(jnp.exp(s_shift), axis=-1, keepdims=True))
    s_log_probs = s_shift - s_lse                # [B, H]

    # teacher softmax(teacher / T): exact normalization so t_probs stays consistent
    # with t_log_probs inside the KL term (no approx-reciprocal bias).
    t_logits = teacher * inv_temp
    t_max = jnp.max(t_logits, axis=-1, keepdims=True)
    t_shift = t_logits - t_max
    t_exp = jnp.exp(t_shift)
    t_sum = jnp.sum(t_exp, axis=-1, keepdims=True)
    t_probs = t_exp / t_sum
    t_log_probs = t_shift - jnp.log(t_sum)

    # F.kl_div(s_log_probs, t_probs, reduction='batchmean') * T**2
    kl = jnp.sum(t_probs * (t_log_probs - s_log_probs))
    loss_ref[0, 0] = kl * loss_scale


def distillation_loss_pallas(student_embedding, teacher_embedding, temperature):
    b, h = teacher_embedding.shape
    kernel = functools.partial(
        _kl_head_kernel,
        inv_temp=float(1.0 / temperature),
        loss_scale=float(temperature * temperature / b),
    )
    # TODO(synk): at vocab-scale H, tile this over H with an online max/sum so the
    # [B, H] blocks stay within v7x's 64 MiB (32 MiB scoped) VMEM.
    loss = pl.pallas_call(
        kernel,
        out_shape=jax.ShapeDtypeStruct((1, 1), jnp.float32),
        grid=(1,),
        in_specs=[
            pl.BlockSpec((b, h), lambda i: (0, 0)),   # student emb (bf16, VMEM)
            pl.BlockSpec((b, h), lambda i: (0, 0)),   # teacher     (f32, VMEM)
        ],
        out_specs=pl.BlockSpec(memory_space=pltpu.MemorySpace.SMEM),
        compiler_params=pltpu.CompilerParams(
            dimension_semantics=("arbitrary",),
        ),
    )(student_embedding, teacher_embedding)
    return loss[0, 0]


# ----------------------------------------------------------------------------
# Full forward: synthetic student model + distillation head
# ----------------------------------------------------------------------------
def distillation_model_forward(params, input_ids, attention_mask,
                               teacher_embedding, temperature=2.0):
    b, s = input_ids.shape
    # Synthetic student model (stand-in for the wrapped HF transformer):
    # token-embedding lookup (XLA glue, bf16 table) + Pallas bf16 matmul projection.
    x_emb = params["embed_table"][input_ids.reshape(-1)]            # [B*S, K] bf16
    hidden = linear_pallas(x_emb, params["w"], params["b"])         # [B*S, H] bf16
    hidden = hidden.reshape(b, s, -1)

    # emb_type='last': torch indexes with (mask.sum(1) - 1); an all-zero mask gives
    # index -1, which torch wraps to the last position -> emulate with % s.
    # Only these B rows of the hidden states are ever consumed, so the gather is a
    # tiny XLA gather (B * H * 2 bytes) feeding the Pallas KL head.
    last_idx = (jnp.sum(attention_mask, axis=1) - 1) % s            # [B]
    student_embedding = hidden[jnp.arange(b), last_idx, :]          # [B, H] bf16

    loss = distillation_loss_pallas(student_embedding, teacher_embedding,
                                    temperature)
    return {"loss": loss, "logits": student_embedding}


# ----------------------------------------------------------------------------
# Pure-JAX reference (same bf16 rounding of params and hidden) for correctness check
# ----------------------------------------------------------------------------
def _reference_forward(params, input_ids, attention_mask, teacher_embedding,
                       temperature):
    b, s = input_ids.shape
    x = params["embed_table"][input_ids.reshape(-1)].astype(jnp.float32)
    w = params["w"].astype(jnp.float32)
    hidden = (jnp.dot(x, w, precision=jax.lax.Precision.HIGHEST)
              + params["b"]).astype(jnp.bfloat16).reshape(b, s, -1)
    last_idx = (jnp.sum(attention_mask, axis=1) - 1) % s
    emb = hidden[jnp.arange(b), last_idx, :]
    T = temperature
    s_log_probs = jax.nn.log_softmax(emb.astype(jnp.float32) / T, axis=-1)
    t_log_probs = jax.nn.log_softmax(teacher_embedding / T, axis=-1)
    t_probs = jnp.exp(t_log_probs)
    loss = jnp.sum(t_probs * (t_log_probs - s_log_probs)) / b * T ** 2
    return {"loss": loss, "logits": emb}


if __name__ == "__main__":
    # Small but lane/MXU-aligned demo shapes (H multiple of 128).
    B, S, HIN, H, VOCAB = 8, 32, 512, 512, 1024
    TEMPERATURE = 2.0

    key = jax.random.PRNGKey(0)
    k_ids, k_emb, k_w, k_b, k_teacher = jax.random.split(key, 5)

    # Params kept in bf16 so the forward never re-casts weights / tables per call.
    params = {
        "embed_table": (jax.random.normal(k_emb, (VOCAB, HIN), jnp.float32)
                        * 0.1).astype(jnp.bfloat16),
        "w": (jax.random.normal(k_w, (HIN, H), jnp.float32) * 0.1).astype(jnp.bfloat16),
        "b": jax.random.normal(k_b, (1, H), jnp.float32) * 0.01,
    }

    input_ids = jax.random.randint(k_ids, (B, S), 0, VOCAB, dtype=jnp.int32)
    # Varied valid lengths, including a degenerate all-zero-mask row (torch -1 wrap).
    lengths = jnp.array([S, 20, 7, 1, S, 13, 0, 3], dtype=jnp.int32)
    attention_mask = (jnp.arange(S)[None, :] < lengths[:, None]).astype(jnp.int32)
    teacher_embedding = jax.random.normal(k_teacher, (B, H), jnp.float32)

    fwd = jax.jit(functools.partial(distillation_model_forward,
                                    temperature=TEMPERATURE))
    out = fwd(params, input_ids, attention_mask, teacher_embedding)
    jax.block_until_ready(out)

    ref = _reference_forward(params, input_ids, attention_mask,
                             teacher_embedding, TEMPERATURE)

    assert out["logits"].shape == (B, H)
    assert out["loss"].shape == ()
    assert bool(jnp.allclose(out["logits"].astype(jnp.float32),
                             ref["logits"].astype(jnp.float32),
                             rtol=2e-2, atol=2e-3)), "logits mismatch vs reference"
    assert bool(jnp.allclose(out["loss"], ref["loss"], rtol=2e-2, atol=1e-3)), \
        "loss mismatch vs reference"
    print("KERNEL_OK")
</pallas_src>

<mosaic_0001>
module attributes {stable_mosaic.version = 11 : i64} {
  func.func @_linear_single_k_kernel(%arg0: i32, %arg1: i32, %arg2: memref<256x512xbf16, #tpu.memory_space<vmem>>, %arg3: memref<512x512xbf16, #tpu.memory_space<vmem>>, %arg4: memref<1x512xf32, #tpu.memory_space<vmem>>, %arg5: memref<256x512xbf16, #tpu.memory_space<vmem>>) attributes {dimension_semantics = [#tpu.dimension_semantics<parallel>, #tpu.dimension_semantics<parallel>], iteration_bounds = array<i64: 1, 1>, scalar_prefetch = 0 : i64, scratch_operands = 0 : i64, tpu.core_type = #tpu.core_type<tc>, window_params = [{transform_indices = @transform_0, window_bounds = array<i64: 256, 512>}, {transform_indices = @transform_1, window_bounds = array<i64: 512, 512>}, {transform_indices = @transform_2, window_bounds = array<i64: 1, 512>}, {transform_indices = @transform_3, window_bounds = array<i64: 256, 512>}]} {
    %c0 = arith.constant 0 : index
    %c0_0 = arith.constant 0 : index
    %0 = vector.load %arg2[%c0, %c0_0] : memref<256x512xbf16, #tpu.memory_space<vmem>>, vector<256x512xbf16>
    %c0_1 = arith.constant 0 : index
    %c0_2 = arith.constant 0 : index
    %1 = vector.load %arg3[%c0_1, %c0_2] : memref<512x512xbf16, #tpu.memory_space<vmem>>, vector<512x512xbf16>
    %cst = arith.constant dense<0.000000e+00> : vector<256x512xf32>
    %2 = tpu.matmul %0, %1, %cst {dimension_numbers = #tpu.dot_dimension_numbers<[1], [0], [0], [1], [0, 0, 1, 1], [], []>} : vector<256x512xbf16>, vector<512x512xbf16>, vector<256x512xf32> -> vector<256x512xf32>
    %c0_3 = arith.constant 0 : index
    %c0_4 = arith.constant 0 : index
    %3 = vector.load %arg4[%c0_3, %c0_4] : memref<1x512xf32, #tpu.memory_space<vmem>>, vector<1x512xf32>
    %4 = vector.broadcast %3 : vector<1x512xf32> to vector<256x512xf32>
    %5 = arith.addf %2, %4 : vector<256x512xf32>
    %6 = arith.truncf %5 : vector<256x512xf32> to vector<256x512xbf16>
    %c0_5 = arith.constant 0 : index
    %c0_6 = arith.constant 0 : index
    %7 = vector.load %arg5[%c0_5, %c0_6] : memref<256x512xbf16, #tpu.memory_space<vmem>>, vector<256x512xbf16>
    tpu.vector_store %arg5[%c0_5, %c0_6], %6 {strides = array<i32>} : memref<256x512xbf16, #tpu.memory_space<vmem>>, vector<256x512xbf16>,
    return
  }
  func.func @transform_0(%arg0: i32, %arg1: i32) -> (i32, i32) {
    %c0_i32 = arith.constant 0 : i32
    %c0_i32_0 = arith.constant 0 : i32
    return %arg0, %c0_i32 : i32, i32
  }
  func.func @transform_1(%arg0: i32, %arg1: i32) -> (i32, i32) {
    %c0_i32 = arith.constant 0 : i32
    %c0_i32_0 = arith.constant 0 : i32
    return %c0_i32, %arg1 : i32, i32
  }
  func.func @transform_2(%arg0: i32, %arg1: i32) -> (i32, i32) {
    %c0_i32 = arith.constant 0 : i32
    %c0_i32_0 = arith.constant 0 : i32
    return %c0_i32, %arg1 : i32, i32
  }
  func.func @transform_3(%arg0: i32, %arg1: i32) -> (i32, i32) {
    %c0_i32 = arith.constant 0 : i32
    return %arg0, %arg1 : i32, i32
  }
}

module attributes {stable_mosaic.version = 11 : i64} {
  func.func @_kl_head_kernel(%arg0: i32, %arg1: memref<8x512xbf16, #tpu.memory_space<vmem>>, %arg2: memref<8x512xf32, #tpu.memory_space<vmem>>, %arg3: memref<1x1xf32, #tpu.memory_space<smem>>) attributes {dimension_semantics = [#tpu.dimension_semantics<arbitrary>], iteration_bounds = array<i64: 1>, scalar_prefetch = 0 : i64, scratch_operands = 0 : i64, tpu.core_type = #tpu.core_type<tc>, window_params = [{pipeline_mode = #tpu.pipeline_mode<synchronous>, transform_indices = @transform_0, window_bounds = array<i64: 8, 512>}, {pipeline_mode = #tpu.pipeline_mode<synchronous>, transform_indices = @transform_1, window_bounds = array<i64: 8, 512>}, {transform_indices = @transform_2, window_bounds = array<i64: 1, 1>}]} {
    %c0 = arith.constant 0 : index
    %c0_0 = arith.constant 0 : index
    %0 = vector.load %arg1[%c0, %c0_0] : memref<8x512xbf16, #tpu.memory_space<vmem>>, vector<8x512xbf16>
    %1 = arith.extf %0 : vector<8x512xbf16> to vector<8x512xf32>
    %c0_1 = arith.constant 0 : index
    %c0_2 = arith.constant 0 : index
    %2 = vector.load %arg2[%c0_1, %c0_2] : memref<8x512xf32, #tpu.memory_space<vmem>>, vector<8x512xf32>
    %cst = arith.constant 5.000000e-01 : f32
    %3 = vector.broadcast %cst : f32 to vector<8x512xf32>
    %4 = arith.mulf %1, %3 : vector<8x512xf32>
    %cst_3 = arith.constant dense<0xFF800000> : vector<8xf32>
    %5 = vector.multi_reduction <maximumf>, %4, %cst_3 [1] : vector<8x512xf32> to vector<8xf32>
    %6 = vector.shape_cast %5 : vector<8xf32> to vector<8x1xf32>
    %7 = vector.broadcast %6 : vector<8x1xf32> to vector<8x512xf32>
    %8 = arith.subf %4, %7 : vector<8x512xf32>
    %9 = math.exp %8 : vector<8x512xf32>
    %cst_4 = arith.constant dense<0.000000e+00> : vector<8xf32>
    %10 = vector.multi_reduction <add>, %9, %cst_4 [1] : vector<8x512xf32> to vector<8xf32>
    %11 = vector.shape_cast %10 : vector<8xf32> to vector<8x1xf32>
    %12 = math.log %11 : vector<8x1xf32>
    %13 = vector.broadcast %12 : vector<8x1xf32> to vector<8x512xf32>
    %14 = arith.subf %8, %13 : vector<8x512xf32>
    %cst_5 = arith.constant 5.000000e-01 : f32
    %15 = vector.broadcast %cst_5 : f32 to vector<8x512xf32>
    %16 = arith.mulf %2, %15 : vector<8x512xf32>
    %cst_6 = arith.constant dense<0xFF800000> : vector<8xf32>
    %17 = vector.multi_reduction <maximumf>, %16, %cst_6 [1] : vector<8x512xf32> to vector<8xf32>
    %18 = vector.shape_cast %17 : vector<8xf32> to vector<8x1xf32>
    %19 = vector.broadcast %18 : vector<8x1xf32> to vector<8x512xf32>
    %20 = arith.subf %16, %19 : vector<8x512xf32>
    %21 = math.exp %20 : vector<8x512xf32>
    %cst_7 = arith.constant dense<0.000000e+00> : vector<8xf32>
    %22 = vector.multi_reduction <add>, %21, %cst_7 [1] : vector<8x512xf32> to vector<8xf32>
    %23 = vector.shape_cast %22 : vector<8xf32> to vector<8x1xf32>
    %24 = vector.broadcast %23 : vector<8x1xf32> to vector<8x512xf32>
    %25 = arith.divf %21, %24 : vector<8x512xf32>
    %26 = math.log %23 : vector<8x1xf32>
    %27 = vector.broadcast %26 : vector<8x1xf32> to vector<8x512xf32>
    %28 = arith.subf %20, %27 : vector<8x512xf32>
    %29 = arith.subf %28, %14 : vector<8x512xf32>
    %30 = arith.mulf %25, %29 : vector<8x512xf32>
    %31 = vector.shape_cast %30 : vector<8x512xf32> to vector<1x8x512xf32>
    %cst_8 = arith.constant dense<0.000000e+00> : vector<1xf32>
    %32 = vector.multi_reduction <add>, %31, %cst_8 [1, 2] : vector<1x8x512xf32> to vector<1xf32>
    %33 = vector.shape_cast %32 : vector<1xf32> to vector<1x1x1xf32>
    %34 = vector.extract %33[0, 0, 0] : f32 from vector<1x1x1xf32>
    %cst_9 = arith.constant 5.000000e-01 : f32
    %35 = arith.mulf %34, %cst_9 : f32
    %c0_10 = arith.constant 0 : index
    %c0_11 = arith.constant 0 : index
    %36 = memref.load %arg3[%c0_10, %c0_11] : memref<1x1xf32, #tpu.memory_space<smem>>
    memref.store %35, %arg3[%c0_10, %c0_11] : memref<1x1xf32, #tpu.memory_space<smem>>
    return
  }
  func.func @transform_0(%arg0: i32) -> (i32, i32) {
    %c0_i32 = arith.constant 0 : i32
    %c0_i32_0 = arith.constant 0 : i32
    %c0_i32_1 = arith.constant 0 : i32
    return %c0_i32, %c0_i32_0 : i32, i32
  }
  func.func @transform_1(%arg0: i32) -> (i32, i32) {
    %c0_i32 = arith.constant 0 : i32
    %c0_i32_0 = arith.constant 0 : i32
    %c0_i32_1 = arith.constant 0 : i32
    return %c0_i32, %c0_i32_0 : i32, i32
  }
  func.func @transform_2(%arg0: i32) -> (i32, i32) {
    %c0_i32 = arith.constant 0 : i32
    %c0_i32_0 = arith.constant 0 : i32
    %c0_i32_1 = arith.constant 0 : i32
    return %c0_i32, %c0_i32_0 : i32, i32
  }
}

</mosaic_0001>

<llo_original>
// kernel: distillation_model_forward.3
$region0: #{distillation_model_forward.3}
  #allocation0 [shape = 'u32[]', space=smem, size = 0x4, offset = 0x4, fixed_abs, tag = 'smem constant byte address 0x4 - core index']
  #allocation1 [shape = 'u32[144,128]{1,0:T(1,128)}', space=vmem, size = 0x12000, scoped, tag = 'internal scratch']
  %s0 = inlined_call_operand.vmem [shape: bf16[8,512], index: 0, kind: input, shape index: {}]
  %s1 = inlined_call_operand.vmem [shape: f32[8,512], index: 1, kind: input, shape index: {}]
  %s2 = inlined_call_operand.hbm [shape: f32[1,1], index: 2, kind: output, shape index: {}]
  %s3 = sld [smem:[#allocation0]]
  $region18: #{distillation_model_forward.3} parent=0
    _
  %s5 = ssub.s32 1, %s3
  %s6 = scalar_select 0, %s5, %s3
  $region1: #{distillation_model_forward.3} parent=0
    #allocation2 [shape = 'u8[512]{0}', space=smem, size = 0x200, scoped, tag = 'output window, operand 0, single buffered']
    #allocation3 [shape = 's32[1]{0}', space=sflag, size = 0x4, scoped, tag = 'scoped memory for distillation_model_forward.3']
    %7 = vsyncpa [#allocation3], 0
    // Predicated region
    $region2: #{distillation_model_forward.3} parent=1 // pred_check
      _
    $region3: #{distillation_model_forward.3} parent=1 // pred_check_branch
      %9 = sbr.rel (0) target = $region5
    $region4: #{distillation_model_forward.3} parent=1 // pred_region
      _
    $region5: #{distillation_model_forward.3} parent=1 // pred_fallthru
      _
    // Predicated region
    $region6: #{distillation_model_forward.3} parent=1 // pred_check
      _
    $region7: #{distillation_model_forward.3} parent=1 // pred_check_branch
      %11 = sbr.rel (0) target = $region9
    $region8: #{distillation_model_forward.3} parent=1 // pred_region
      _
    $region9: #{distillation_model_forward.3} parent=1 // pred_fallthru
      _
    %v12 = vld [vmem:[%s0] sm:$0xff]
    %v13 = vld [vmem:[%s0 + $0x8] sm:$0xff]
    %v14 = vunpack.c.l.bf16 %v12
    %v15 = vunpack.c.h.bf16 %v12
    %v16 = vunpack.c.l.bf16 %v13
    %v17 = vunpack.c.h.bf16 %v13
    %v18 = vld [vmem:[%s1] sm:$0xff]
    %v19 = vld [vmem:[%s1 + $0x8] sm:$0xff]
    %v20 = vld [vmem:[%s1 + $0x10] sm:$0xff]
    %v21 = vld [vmem:[%s1 + $0x18] sm:$0xff]
    %v22 = vmul.f32 %v14, 0.5
    %v23 = vmul.f32 %v15, 0.5
    %v24 = vmul.f32 %v16, 0.5
    %v25 = vmul.f32 %v17, 0.5
    %v26 = vmax.f32 %v22, %v23
    %v27 = vmax.f32 %v24, %v25
    %v28 = vmax.f32 %v26, %v27
    %29 = vmax.xlane.f32.xlu0 %v28
    %v30 = vpop.xlane.xlu0 %29
    %v31 = vsub.f32 %v22, %v30
    %v32 = vsub.f32 %v23, %v30
    %v33 = vsub.f32 %v24, %v30
    %v34 = vsub.f32 %v25, %v30
    %v35 = vmul.f32 %v31, 1.442695
    %v36 = vpow.pop %v35
    %v37 = vmul.f32 %v32, 1.442695
    %v38 = vpow.pop %v37
    %v39 = vmul.f32 %v33, 1.442695
    %v40 = vpow.pop %v39
    %v41 = vmul.f32 %v34, 1.442695
    %v42 = vpow.pop %v41
    %v43 = vadd.f32 %v36, %v38
    %v44 = vadd.f32 %v43, %v40
    %v45 = vadd.f32 %v44, %v42
    %46 = vadd.xlane.f32.xlu0 %v45
    %v47 = vpop.xlane.xlu0 %46
    %v48 = vlog2.pop %v47
    %v49 = vmul.f32 %v48, 0.6931472
    %v50 = vsub.f32 %v31, %v49
    %v51 = vsub.f32 %v32, %v49
    %v52 = vsub.f32 %v33, %v49
    %v53 = vsub.f32 %v34, %v49
    %v54 = vmul.f32 %v18, 0.5
    %v55 = vmul.f32 %v19, 0.5
    %v56 = vmul.f32 %v20, 0.5
    %v57 = vmul.f32 %v21, 0.5
    %v58 = vmax.f32 %v54, %v55
    %v59 = vmax.f32 %v56, %v57
    %v60 = vmax.f32 %v58, %v59
    %61 = vmax.xlane.f32.xlu0 %v60
    %v62 = vpop.xlane.xlu0 %61
    %v63 = vsub.f32 %v54, %v62
    %v64 = vsub.f32 %v55, %v62
    %v65 = vsub.f32 %v56, %v62
    %v66 = vsub.f32 %v57, %v62
    %v67 = vmul.f32 %v63, 1.442695
    %v68 = vpow.pop %v67
    %v69 = vmul.f32 %v64, 1.442695
    %v70 = vpow.pop %v69
    %v71 = vmul.f32 %v65, 1.442695
    %v72 = vpow.pop %v71
    %v73 = vmul.f32 %v66, 1.442695
    %v74 = vpow.pop %v73
    %v75 = vadd.f32 %v68, %v70
    %v76 = vadd.f32 %v75, %v72
    %v77 = vadd.f32 %v76, %v74
    %78 = vadd.xlane.f32.xlu0 %v77
    %v79 = vpop.xlane.xlu0 %78
    %v80 = vrcp.pop %v79
    %v81 = vmul.f32 %v68, %v80
    %v82 = vmul.f32 %v70, %v80
    %v83 = vmul.f32 %v72, %v80
    %v84 = vmul.f32 %v74, %v80
    %v85 = vlog2.pop %v79
    %v86 = vmul.f32 %v85, 0.6931472
    %v87 = vsub.f32 %v63, %v86
    %v88 = vsub.f32 %v64, %v86
    %v89 = vsub.f32 %v65, %v86
    %v90 = vsub.f32 %v66, %v86
    %v91 = vsub.f32 %v87, %v50
    %v92 = vsub.f32 %v88, %v51
    %v93 = vsub.f32 %v89, %v52
    %v94 = vsub.f32 %v90, %v53
    %v95 = vmul.f32 %v81, %v91
    %v96 = vmul.f32 %v82, %v92
    %v97 = vmul.f32 %v83, %v93
    %v98 = vmul.f32 %v84, %v94
    %v99 = vadd.f32 %v95, %v96
    %v100 = vadd.f32 %v99, %v97
    %v101 = vadd.f32 %v100, %v98
    %102 = vadd.xlane.f32.xlu0 %v101
    %v103 = vpop.xlane.xlu0 %102
    %v104 = vrot.slane %v103, 4
    %v105 = vadd.f32 %v103, %v104
    %v106 = vrot.slane %v105, 2
    %v107 = vadd.f32 %v105, %v106
    %v108 = vrot.slane %v107, 1
    %v109 = vadd.f32 %v107, %v108
    %s110 = vtos %v109
    %s111 = smul.f32 %s110, 0.5
    %s112 = scalar_lea.smem [#allocation2], 0
    %113 = sst [smem:[%s112]] %s111
    // Predicated region
    $region10: #{distillation_model_forward.3} parent=1 // pred_check
      _
    $region11: #{distillation_model_forward.3} parent=1 // pred_check_branch
      %115 = sbr.rel (0) target = $region13
    $region12: #{distillation_model_forward.3} parent=1 // pred_region
      %s117 = ssub.s32 16, 16
      %118 = vsyncadd [#allocation3], %s117
      %121 = dma.smem_to_hbm [#allocation2], 16, %s2, [#allocation3]
    $region13: #{distillation_model_forward.3} parent=1 // pred_fallthru
      _
    // Predicated region
    $region14: #{distillation_model_forward.3} parent=1 // pred_check
      _
    $region15: #{distillation_model_forward.3} parent=1 // pred_check_branch
      %123 = sbr.rel (0) target = $region17
    $region16: #{distillation_model_forward.3} parent=1 // pred_region
      %124 = dma.done [#allocation3], 16
    $region17: #{distillation_model_forward.3} parent=1 // pred_fallthru
      _
    %125 = sfence
    %126 = vsyncpa [#allocation3], 1

// kernel: distillation_model_forward.2
$region0: #{distillation_model_forward.2}
  #allocation0 [shape = 'u32[]', space=smem, size = 0x4, offset = 0x4, fixed_abs, tag = 'smem constant byte address 0x4 - core index']
  #allocation1 [shape = 'u32[144,128]{1,0:T(1,128)}', space=vmem, size = 0x12000, scoped, tag = 'internal scratch']
  %s0 = inlined_call_operand.vmem [shape: bf16[256,512], index: 0, kind: input, shape index: {}]
  %s1 = inlined_call_operand.vmem [shape: bf16[512,512], index: 1, kind: input, shape index: {}]
  %s2 = inlined_call_operand.vmem [shape: f32[1,512], index: 2, kind: input, shape index: {}]
  %s3 = inlined_call_operand.vmem [shape: bf16[256,512], index: 3, kind: output, shape index: {}]
  %s4 = sld [smem:[#allocation0]]
  $region22: #{distillation_model_forward.2} parent=0
    _
  %s6 = ssub.s32 1, %s4
  %s7 = scalar_select 0, %s6, %s4
  // Predicated region
  $region2: #{distillation_model_forward.2} parent=0 // pred_check
    _
  $region3: #{distillation_model_forward.2} parent=0 // pred_check_branch
    %9 = sbr.rel (0) target = $region5
  $region4: #{distillation_model_forward.2} parent=0 // pred_region
    _
  $region5: #{distillation_model_forward.2} parent=0 // pred_fallthru
    _
  // Predicated region
  $region6: #{distillation_model_forward.2} parent=0 // pred_check
    _
  $region7: #{distillation_model_forward.2} parent=0 // pred_check_branch
    %11 = sbr.rel (0) target = $region9
  $region8: #{distillation_model_forward.2} parent=0 // pred_region
    _
  $region9: #{distillation_model_forward.2} parent=0 // pred_fallthru
    _
  // Predicated region
  $region10: #{distillation_model_forward.2} parent=0 // pred_check
    _
  $region11: #{distillation_model_forward.2} parent=0 // pred_check_branch
    %13 = sbr.rel (0) target = $region13
  $region12: #{distillation_model_forward.2} parent=0 // pred_region
    _
  $region13: #{distillation_model_forward.2} parent=0 // pred_fallthru
    _
  %v14 = vld [vmem:[%s0] sm:$0xff]
  %v15 = vld [vmem:[%s0 + $0x8] sm:$0xff]
  %v16 = vld [vmem:[%s0 + $0x10] sm:$0xff]
  %v17 = vld [vmem:[%s0 + $0x18] sm:$0xff]
  %v18 = vld [vmem:[%s0 + $0x20] sm:$0xff]
  %v19 = vld [vmem:[%s0 + $0x28] sm:$0xff]
  %v20 = vld [vmem:[%s0 + $0x30] sm:$0xff]
  %v21 = vld [vmem:[%s0 + $0x38] sm:$0xff]
  %v22 = vld [vmem:[%s0 + $0x40] sm:$0xff]
  %v23 = vld [vmem:[%s0 + $0x48] sm:$0xff]
  %v24 = vld [vmem:[%s0 + $0x50] sm:$0xff]
  %v25 = vld [vmem:[%s0 + $0x58] sm:$0xff]
  %v26 = vld [vmem:[%s0 + $0x60] sm:$0xff]
  %v27 = vld [vmem:[%s0 + $0x68] sm:$0xff]
  %v28 = vld [vmem:[%s0 + $0x70] sm:$0xff]
  %v29 = vld [vmem:[%s0 + $0x78] sm:$0xff]
  %v30 = vld [vmem:[%s0 + $0x80] sm:$0xff]
  %v31 = vld [vmem:[%s0 + $0x88] sm:$0xff]
  %v32 = vld [vmem:[%s0 + $0x90] sm:$0xff]
  %v33 = vld [vmem:[%s0 + $0x98] sm:$0xff]
  %v34 = vld [vmem:[%s0 + $0xa0] sm:$0xff]
  %v35 = vld [vmem:[%s0 + $0xa8] sm:$0xff]
  %v36 = vld [vmem:[%s0 + $0xb0] sm:$0xff]
  %v37 = vld [vmem:[%s0 + $0xb8] sm:$0xff]
  %v38 = vld [vmem:[%s0 + $0xc0] sm:$0xff]
  %v39 = vld [vmem:[%s0 + $0xc8] sm:$0xff]
  %v40 = vld [vmem:[%s0 + $0xd0] sm:$0xff]
  %v41 = vld [vmem:[%s0 + $0xd8] sm:$0xff]
  %v42 = vld [vmem:[%s0 + $0xe0] sm:$0xff]
  %v43 = vld [vmem:[%s0 + $0xe8] sm:$0xff]
  %v44 = vld [vmem:[%s0 + $0xf0] sm:$0xff]
  %v45 = vld [vmem:[%s0 + $0xf8] sm:$0xff]
  %v46 = vld [vmem:[%s0 + $0x100] sm:$0xff]
  %v47 = vld [vmem:[%s0 + $0x108] sm:$0xff]
  %v48 = vld [vmem:[%s0 + $0x110] sm:$0xff]
  %v49 = vld [vmem:[%s0 + $0x118] sm:$0xff]
  %v50 = vld [vmem:[%s0 + $0x120] sm:$0xff]
  %v51 = vld [vmem:[%s0 + $0x128] sm:$0xff]
  %v52 = vld [vmem:[%s0 + $0x130] sm:$0xff]
  %v53 = vld [vmem:[%s0 + $0x138] sm:$0xff]
  %v54 = vld [vmem:[%s0 + $0x140] sm:$0xff]
  %v55 = vld [vmem:[%s0 + $0x148] sm:$0xff]
  %v56 = vld [vmem:[%s0 + $0x150] sm:$0xff]
  %v57 = vld [vmem:[%s0 + $0x158] sm:$0xff]
  %v58 = vld [vmem:[%s0 + $0x160] sm:$0xff]
  %v59 = vld [vmem:[%s0 + $0x168] sm:$0xff]
  %v60 = vld [vmem:[%s0 + $0x170] sm:$0xff]
  %v61 = vld [vmem:[%s0 + $0x178] sm:$0xff]
  %v62 = vld [vmem:[%s0 + $0x180] sm:$0xff]
  %v63 = vld [vmem:[%s0 + $0x188] sm:$0xff]
  %v64 = vld [vmem:[%s0 + $0x190] sm:$0xff]
  %v65 = vld [vmem:[%s0 + $0x198] sm:$0xff]
  %v66 = vld [vmem:[%s0 + $0x1a0] sm:$0xff]
  %v67 = vld [vmem:[%s0 + $0x1a8] sm:$0xff]
  %v68 = vld [vmem:[%s0 + $0x1b0] sm:$0xff]
  %v69 = vld [vmem:[%s0 + $0x1b8] sm:$0xff]
  %v70 = vld [vmem:[%s0 + $0x1c0] sm:$0xff]
  %v71 = vld [vmem:[%s0 + $0x1c8] sm:$0xff]
  %v72 = vld [vmem:[%s0 + $0x1d0] sm:$0xff]
  %v73 = vld [vmem:[%s0 + $0x1d8] sm:$0xff]
  %v74 = vld [vmem:[%s0 + $0x1e0] sm:$0xff]
  %v75 = vld [vmem:[%s0 + $0x1e8] sm:$0xff]
  %v76 = vld [vmem:[%s0 + $0x1f0] sm:$0xff]
  %v77 = vld [vmem:[%s0 + $0x1f8] sm:$0xff]
  %v78 = vld [vmem:[%s1] sm:$0xff]
  %v79 = vld [vmem:[%s1 + $0x8] sm:$0xff]
  %v80 = vld [vmem:[%s1 + $0x10] sm:$0xff]
  %v81 = vld [vmem:[%s1 + $0x18] sm:$0xff]
  %v82 = vld [vmem:[%s1 + $0x20] sm:$0xff]
  %v83 = vld [vmem:[%s1 + $0x28] sm:$0xff]
  %v84 = vld [vmem:[%s1 + $0x30] sm:$0xff]
  %v85 = vld [vmem:[%s1 + $0x38] sm:$0xff]
  %v86 = vld [vmem:[%s1 + $0x40] sm:$0xff]
  %v87 = vld [vmem:[%s1 + $0x48] sm:$0xff]
  %v88 = vld [vmem:[%s1 + $0x50] sm:$0xff]
  %v89 = vld [vmem:[%s1 + $0x58] sm:$0xff]
  %v90 = vld [vmem:[%s1 + $0x60] sm:$0xff]
  %v91 = vld [vmem:[%s1 + $0x68] sm:$0xff]
  %v92 = vld [vmem:[%s1 + $0x70] sm:$0xff]
  %v93 = vld [vmem:[%s1 + $0x78] sm:$0xff]
  %v94 = vld [vmem:[%s1 + $0x80] sm:$0xff]
  %v95 = vld [vmem:[%s1 + $0x88] sm:$0xff]
  %v96 = vld [vmem:[%s1 + $0x90] sm:$0xff]
  %v97 = vld [vmem:[%s1 + $0x98] sm:$0xff]
  %v98 = vld [vmem:[%s1 + $0xa0] sm:$0xff]
  %v99 = vld [vmem:[%s1 + $0xa8] sm:$0xff]
  %v100 = vld [vmem:[%s1 + $0xb0] sm:$0xff]
  %v101 = vld [vmem:[%s1 + $0xb8] sm:$0xff]
  %v102 = vld [vmem:[%s1 + $0xc0] sm:$0xff]
  %v103 = vld [vmem:[%s1 + $0xc8] sm:$0xff]
  %v104 = vld [vmem:[%s1 + $0xd0] sm:$0xff]
  %v105 = vld [vmem:[%s1 + $0xd8] sm:$0xff]
  %v106 = vld [vmem:[%s1 + $0xe0] sm:$0xff]
  %v107 = vld [vmem:[%s1 + $0xe8] sm:$0xff]
  %v108 = vld [vmem:[%s1 + $0xf0] sm:$0xff]
  %v109 = vld [vmem:[%s1 + $0xf8] sm:$0xff]
  %v110 = vld [vmem:[%s1 + $0x100] sm:$0xff]
  %v111 = vld [vmem:[%s1 + $0x108] sm:$0xff]
  %v112 = vld [vmem:[%s1 + $0x110] sm:$0xff]
  %v113 = vld [vmem:[%s1 + $0x118] sm:$0xff]
  %v114 = vld [vmem:[%s1 + $0x120] sm:$0xff]
  %v115 = vld [vmem:[%s1 + $0x128] sm:$0xff]
  %v116 = vld [vmem:[%s1 + $0x130] sm:$0xff]
  %v117 = vld [vmem:[%s1 + $0x138] sm:$0xff]
  %v118 = vld [vmem:[%s1 + $0x140] sm:$0xff]
  %v119 = vld [vmem:[%s1 + $0x148] sm:$0xff]
  %v120 = vld [vmem:[%s1 + $0x150] sm:$0xff]
  %v121 = vld [vmem:[%s1 + $0x158] sm:$0xff]
  %v122 = vld [vmem:[%s1 + $0x160] sm:$0xff]
  %v123 = vld [vmem:[%s1 + $0x168] sm:$0xff]
  %v124 = vld [vmem:[%s1 + $0x170] sm:$0xff]
  %v125 = vld [vmem:[%s1 + $0x178] sm:$0xff]
  %v126 = vld [vmem:[%s1 + $0x180] sm:$0xff]
  %v127 = vld [vmem:[%s1 + $0x188] sm:$0xff]
  %v128 = vld [vmem:[%s1 + $0x190] sm:$0xff]
  %v129 = vld [vmem:[%s1 + $0x198] sm:$0xff]
  %v130 = vld [vmem:[%s1 + $0x1a0] sm:$0xff]
  %v131 = vld [vmem:[%s1 + $0x1a8] sm:$0xff]
  %v132 = vld [vmem:[%s1 + $0x1b0] sm:$0xff]
  %v133 = vld [vmem:[%s1 + $0x1b8] sm:$0xff]
  %v134 = vld [vmem:[%s1 + $0x1c0] sm:$0xff]
  %v135 = vld [vmem:[%s1 + $0x1c8] sm:$0xff]
  %v136 = vld [vmem:[%s1 + $0x1d0] sm:$0xff]
  %v137 = vld [vmem:[%s1 + $0x1d8] sm:$0xff]
  %v138 = vld [vmem:[%s1 + $0x1e0] sm:$0xff]
  %v139 = vld [vmem:[%s1 + $0x1e8] sm:$0xff]
  %v140 = vld [vmem:[%s1 + $0x1f0] sm:$0xff]
  %v141 = vld [vmem:[%s1 + $0x1f8] sm:$0xff]
  %v142 = vld [vmem:[%s1 + $0x200] sm:$0xff]
  %v143 = vld [vmem:[%s1 + $0x208] sm:$0xff]
  %v144 = vld [vmem:[%s1 + $0x210] sm:$0xff]
  %v145 = vld [vmem:[%s1 + $0x218] sm:$0xff]
  %v146 = vld [vmem:[%s1 + $0x220] sm:$0xff]
  %v147 = vld [vmem:[%s1 + $0x228] sm:$0xff]
  %v148 = vld [vmem:[%s1 + $0x230] sm:$0xff]
  %v149 = vld [vmem:[%s1 + $0x238] sm:$0xff]
  %v150 = vld [vmem:[%s1 + $0x240] sm:$0xff]
  %v151 = vld [vmem:[%s1 + $0x248] sm:$0xff]
  %v152 = vld [vmem:[%s1 + $0x250] sm:$0xff]
  %v153 = vld [vmem:[%s1 + $0x258] sm:$0xff]
  %v154 = vld [vmem:[%s1 + $0x260] sm:$0xff]
  %v155 = vld [vmem:[%s1 + $0x268] sm:$0xff]
  %v156 = vld [vmem:[%s1 + $0x270] sm:$0xff]
  %v157 = vld [vmem:[%s1 + $0x278] sm:$0xff]
  %v158 = vld [vmem:[%s1 + $0x280] sm:$0xff]
  %v159 = vld [vmem:[%s1 + $0x288] sm:$0xff]
  %v160 = vld [vmem:[%s1 + $0x290] sm:$0xff]
  %v161 = vld [vmem:[%s1 + $0x298] sm:$0xff]
  %v162 = vld [vmem:[%s1 + $0x2a0] sm:$0xff]
  %v163 = vld [vmem:[%s1 + $0x2a8] sm:$0xff]
  %v164 = vld [vmem:[%s1 + $0x2b0] sm:$0xff]
  %v165 = vld [vmem:[%s1 + $0x2b8] sm:$0xff]
  %v166 = vld [vmem:[%s1 + $0x2c0] sm:$0xff]
  %v167 = vld [vmem:[%s1 + $0x2c8] sm:$0xff]
  %v168 = vld [vmem:[%s1 + $0x2d0] sm:$0xff]
  %v169 = vld [vmem:[%s1 + $0x2d8] sm:$0xff]
  %v170 = vld [vmem:[%s1 + $0x2e0] sm:$0xff]
  %v171 = vld [vmem:[%s1 + $0x2e8] sm:$0xff]
  %v172 = vld [vmem:[%s1 + $0x2f0] sm:$0xff]
  %v173 = vld [vmem:[%s1 + $0x2f8] sm:$0xff]
  %v174 = vld [vmem:[%s1 + $0x300] sm:$0xff]
  %v175 = vld [vmem:[%s1 + $0x308] sm:$0xff]
  %v176 = vld [vmem:[%s1 + $0x310] sm:$0xff]
  %v177 = vld [vmem:[%s1 + $0x318] sm:$0xff]
  %v178 = vld [vmem:[%s1 + $0x320] sm:$0xff]
  %v179 = vld [vmem:[%s1 + $0x328] sm:$0xff]
  %v180 = vld [vmem:[%s1 + $0x330] sm:$0xff]
  %v181 = vld [vmem:[%s1 + $0x338] sm:$0xff]
  %v182 = vld [vmem:[%s1 + $0x340] sm:$0xff]
  %v183 = vld [vmem:[%s1 + $0x348] sm:$0xff]
  %v184 = vld [vmem:[%s1 + $0x350] sm:$0xff]
  %v185 = vld [vmem:[%s1 + $0x358] sm:$0xff]
  %v186 = vld [vmem:[%s1 + $0x360] sm:$0xff]
  %v187 = vld [vmem:[%s1 + $0x368] sm:$0xff]
  %v188 = vld [vmem:[%s1 + $0x370] sm:$0xff]
  %v189 = vld [vmem:[%s1 + $0x378] sm:$0xff]
  %v190 = vld [vmem:[%s1 + $0x380] sm:$0xff]
  %v191 = vld [vmem:[%s1 + $0x388] sm:$0xff]
  %v192 = vld [vmem:[%s1 + $0x390] sm:$0xff]
  %v193 = vld [vmem:[%s1 + $0x398] sm:$0xff]
  %v194 = vld [vmem:[%s1 + $0x3a0] sm:$0xff]
  %v195 = vld [vmem:[%s1 + $0x3a8] sm:$0xff]
  %v196 = vld [vmem:[%s1 + $0x3b0] sm:$0xff]
  %v197 = vld [vmem:[%s1 + $0x3b8] sm:$0xff]
  %v198 = vld [vmem:[%s1 + $0x3c0] sm:$0xff]
  %v199 = vld [vmem:[%s1 + $0x3c8] sm:$0xff]
  %v200 = vld [vmem:[%s1 + $0x3d0] sm:$0xff]
  %v201 = vld [vmem:[%s1 + $0x3d8] sm:$0xff]
  %v202 = vld [vmem:[%s1 + $0x3e0] sm:$0xff]
  %v203 = vld [vmem:[%s1 + $0x3e8] sm:$0xff]
  %v204 = vld [vmem:[%s1 + $0x3f0] sm:$0xff]
  %v205 = vld [vmem:[%s1 + $0x3f8] sm:$0xff]
  %v206 = vld [vmem:[%s2] sm:$0xf]
  %v208 = vlaneseq
  %v209 = vshrl.u32 %v208, 7
  %v210 = vsub.s32 0, %v209
  %v211 = vrot.slane %v206, %v210
  %v212 = vlaneseq
  %v213 = vshrl.u32 %v212, 7
  %v214 = vsub.s32 1, %v213
  %v215 = vrot.slane %v206, %v214
  %v216 = vlaneseq
  %v217 = vshrl.u32 %v216, 7
  %v218 = vsub.s32 2, %v217
  %v219 = vrot.slane %v206, %v218
  %v220 = vlaneseq
  %v221 = vshrl.u32 %v220, 7
  %v222 = vsub.s32 3, %v221
  %v223 = vrot.slane %v206, %v222
  %v292 = vunpack.c.l.b16 %v14
  %v293 = vunpack.c.h.b16 %v14
  %v294 = vunpack.c.l.b16 %v15
  %v295 = vunpack.c.h.b16 %v15
  %v296 = vunpack.c.l.b16 %v16
  %v297 = vunpack.c.h.b16 %v16
  %v298 = vunpack.c.l.b16 %v17
  %v299 = vunpack.c.h.b16 %v17
  %v300 = vunpack.c.l.b16 %v18
  %v301 = vunpack.c.h.b16 %v18
  %v302 = vunpack.c.l.b16 %v19
  %v303 = vunpack.c.h.b16 %v19
  %v304 = vunpack.c.l.b16 %v20
  %v305 = vunpack.c.h.b16 %v20
  %v306 = vunpack.c.l.b16 %v21
  %v307 = vunpack.c.h.b16 %v21
  %v308 = vunpack.c.l.b16 %v22
  %v309 = vunpack.c.h.b16 %v22
  %v310 = vunpack.c.l.b16 %v23
  %v311 = vunpack.c.h.b16 %v23
  %v312 = vunpack.c.l.b16 %v24
  %v313 = vunpack.c.h.b16 %v24
  %v314 = vunpack.c.l.b16 %v25
  %v315 = vunpack.c.h.b16 %v25
  %v316 = vunpack.c.l.b16 %v26
  %v317 = vunpack.c.h.b16 %v26
  %v318 = vunpack.c.l.b16 %v27
  %v319 = vunpack.c.h.b16 %v27
  %v320 = vunpack.c.l.b16 %v28
  %v321 = vunpack.c.h.b16 %v28
  %v322 = vunpack.c.l.b16 %v29
  %v323 = vunpack.c.h.b16 %v29
  %v324 = vunpack.c.l.b16 %v30
  %v325 = vunpack.c.h.b16 %v30
  %v326 = vunpack.c.l.b16 %v31
  %v327 = vunpack.c.h.b16 %v31
  %v328 = vunpack.c.l.b16 %v32
  %v329 = vunpack.c.h.b16 %v32
  %v330 = vunpack.c.l.b16 %v33
  %v331 = vunpack.c.h.b16 %v33
  %v332 = vunpack.c.l.b16 %v34
  %v333 = vunpack.c.h.b16 %v34
  %v334 = vunpack.c.l.b16 %v35
  %v335 = vunpack.c.h.b16 %v35
  %v336 = vunpack.c.l.b16 %v36
  %v337 = vunpack.c.h.b16 %v36
  %v338 = vunpack.c.l.b16 %v37
  %v339 = vunpack.c.h.b16 %v37
  %v340 = vunpack.c.l.b16 %v38
  %v341 = vunpack.c.h.b16 %v38
  %v342 = vunpack.c.l.b16 %v39
  %v343 = vunpack.c.h.b16 %v39
  %v344 = vunpack.c.l.b16 %v40
  %v345 = vunpack.c.h.b16 %v40
  %v346 = vunpack.c.l.b16 %v41
  %v347 = vunpack.c.h.b16 %v41
  %v348 = vunpack.c.l.b16 %v42
  %v349 = vunpack.c.h.b16 %v42
  %v350 = vunpack.c.l.b16 %v43
  %v351 = vunpack.c.h.b16 %v43
  %v352 = vunpack.c.l.b16 %v44
  %v353 = vunpack.c.h.b16 %v44
  %v354 = vunpack.c.l.b16 %v45
  %v355 = vunpack.c.h.b16 %v45
  %v356 = vunpack.c.l.b16 %v46
  %v357 = vunpack.c.h.b16 %v46
  %v358 = vunpack.c.l.b16 %v47
  %v359 = vunpack.c.h.b16 %v47
  %v360 = vunpack.c.l.b16 %v48
  %v361 = vunpack.c.h.b16 %v48
  %v362 = vunpack.c.l.b16 %v49
  %v363 = vunpack.c.h.b16 %v49
  %v364 = vunpack.c.l.b16 %v50
  %v365 = vunpack.c.h.b16 %v50
  %v366 = vunpack.c.l.b16 %v51
  %v367 = vunpack.c.h.b16 %v51
  %v368 = vunpack.c.l.b16 %v52
  %v369 = vunpack.c.h.b16 %v52
  %v370 = vunpack.c.l.b16 %v53
  %v371 = vunpack.c.h.b16 %v53
  %v372 = vunpack.c.l.b16 %v54
  %v373 = vunpack.c.h.b16 %v54
  %v374 = vunpack.c.l.b16 %v55
  %v375 = vunpack.c.h.b16 %v55
  %v376 = vunpack.c.l.b16 %v56
  %v377 = vunpack.c.h.b16 %v56
  %v378 = vunpack.c.l.b16 %v57
  %v379 = vunpack.c.h.b16 %v57
  %v380 = vunpack.c.l.b16 %v58
  %v381 = vunpack.c.h.b16 %v58
  %v382 = vunpack.c.l.b16 %v59
  %v383 = vunpack.c.h.b16 %v59
  %v384 = vunpack.c.l.b16 %v60
  %v385 = vunpack.c.h.b16 %v60
  %v386 = vunpack.c.l.b16 %v61
  %v387 = vunpack.c.h.b16 %v61
  %v388 = vunpack.c.l.b16 %v62
  %v389 = vunpack.c.h.b16 %v62
  %v390 = vunpack.c.l.b16 %v63
  %v391 = vunpack.c.h.b16 %v63
  %v392 = vunpack.c.l.b16 %v64
  %v393 = vunpack.c.h.b16 %v64
  %v394 = vunpack.c.l.b16 %v65
  %v395 = vunpack.c.h.b16 %v65
  %v396 = vunpack.c.l.b16 %v66
  %v397 = vunpack.c.h.b16 %v66
  %v398 = vunpack.c.l.b16 %v67
  %v399 = vunpack.c.h.b16 %v67
  %v400 = vunpack.c.l.b16 %v68
  %v401 = vunpack.c.h.b16 %v68
  %v402 = vunpack.c.l.b16 %v69
  %v403 = vunpack.c.h.b16 %v69
  %v404 = vunpack.c.l.b16 %v70
  %v405 = vunpack.c.h.b16 %v70
  %v406 = vunpack.c.l.b16 %v71
  %v407 = vunpack.c.h.b16 %v71
  %v408 = vunpack.c.l.b16 %v72
  %v409 = vunpack.c.h.b16 %v72
  %v410 = vunpack.c.l.b16 %v73
  %v411 = vunpack.c.h.b16 %v73
  %v412 = vunpack.c.l.b16 %v74
  %v413 = vunpack.c.h.b16 %v74
  %v414 = vunpack.c.l.b16 %v75
  %v415 = vunpack.c.h.b16 %v75
  %v416 = vunpack.c.l.b16 %v76
  %v417 = vunpack.c.h.b16 %v76
  %v418 = vunpack.c.l.b16 %v77
  %v419 = vunpack.c.h.b16 %v77
  %v420 = vpack.c.b16 %v296, %v292
  %v421 = vpack.c.b16 %v297, %v293
  %v422 = vpack.c.b16 %v298, %v294
  %v423 = vpack.c.b16 %v299, %v295
  %v424 = vpack.c.b16 %v304, %v300
  %v425 = vpack.c.b16 %v305, %v301
  %v426 = vpack.c.b16 %v306, %v302
  %v427 = vpack.c.b16 %v307, %v303
  %v428 = vpack.c.b16 %v312, %v308
  %v429 = vpack.c.b16 %v313, %v309
  %v430 = vpack.c.b16 %v314, %v310
  %v431 = vpack.c.b16 %v315, %v311
  %v432 = vpack.c.b16 %v320, %v316
  %v433 = vpack.c.b16 %v321, %v317
  %v434 = vpack.c.b16 %v322, %v318
  %v435 = vpack.c.b16 %v323, %v319
  %v436 = vpack.c.b16 %v328, %v324
  %v437 = vpack.c.b16 %v329, %v325
  %v438 = vpack.c.b16 %v330, %v326
  %v439 = vpack.c.b16 %v331, %v327
  %v440 = vpack.c.b16 %v336, %v332
  %v441 = vpack.c.b16 %v337, %v333
  %v442 = vpack.c.b16 %v338, %v334
  %v443 = vpack.c.b16 %v339, %v335
  %v444 = vpack.c.b16 %v344, %v340
  %v445 = vpack.c.b16 %v345, %v341
  %v446 = vpack.c.b16 %v346, %v342
  %v447 = vpack.c.b16 %v347, %v343
  %v448 = vpack.c.b16 %v352, %v348
  %v449 = vpack.c.b16 %v353, %v349
  %v450 = vpack.c.b16 %v354, %v350
  %v451 = vpack.c.b16 %v355, %v351
  %v452 = vpack.c.b16 %v360, %v356
  %v453 = vpack.c.b16 %v361, %v357
  %v454 = vpack.c.b16 %v362, %v358
  %v455 = vpack.c.b16 %v363, %v359
  %v456 = vpack.c.b16 %v368, %v364
  %v457 = vpack.c.b16 %v369, %v365
  %v458 = vpack.c.b16 %v370, %v366
  %v459 = vpack.c.b16 %v371, %v367
  %v460 = vpack.c.b16 %v376, %v372
  %v461 = vpack.c.b16 %v377, %v373
  %v462 = vpack.c.b16 %v378, %v374
  %v463 = vpack.c.b16 %v379, %v375
  %v464 = vpack.c.b16 %v384, %v380
  %v465 = vpack.c.b16 %v385, %v381
  %v466 = vpack.c.b16 %v386, %v382
  %v467 = vpack.c.b16 %v387, %v383
  %v468 = vpack.c.b16 %v392, %v388
  %v469 = vpack.c.b16 %v393, %v389
  %v470 = vpack.c.b16 %v394, %v390
  %v471 = vpack.c.b16 %v395, %v391
  %v472 = vpack.c.b16 %v400, %v396
  %v473 = vpack.c.b16 %v401, %v397
  %v474 = vpack.c.b16 %v402, %v398
  %v475 = vpack.c.b16 %v403, %v399
  %v476 = vpack.c.b16 %v408, %v404
  %v477 = vpack.c.b16 %v409, %v405
  %v478 = vpack.c.b16 %v410, %v406
  %v479 = vpack.c.b16 %v411, %v407
  %v480 = vpack.c.b16 %v416, %v412
  %v481 = vpack.c.b16 %v417, %v413
  %v482 = vpack.c.b16 %v418, %v414
  %v483 = vpack.c.b16 %v419, %v415
  %v676 = vunpack.c.l.b16 %v78
  %v677 = vunpack.c.h.b16 %v78
  %v678 = vunpack.c.l.b16 %v79
  %v679 = vunpack.c.h.b16 %v79
  %v680 = vunpack.c.l.b16 %v80
  %v681 = vunpack.c.h.b16 %v80
  %v682 = vunpack.c.l.b16 %v81
  %v683 = vunpack.c.h.b16 %v81
  %v684 = vunpack.c.l.b16 %v82
  %v685 = vunpack.c.h.b16 %v82
  %v686 = vunpack.c.l.b16 %v83
  %v687 = vunpack.c.h.b16 %v83
  %v688 = vunpack.c.l.b16 %v84
  %v689 = vunpack.c.h.b16 %v84
  %v690 = vunpack.c.l.b16 %v85
  %v691 = vunpack.c.h.b16 %v85
  %v692 = vunpack.c.l.b16 %v86
  %v693 = vunpack.c.h.b16 %v86
  %v694 = vunpack.c.l.b16 %v87
  %v695 = vunpack.c.h.b16 %v87
  %v696 = vunpack.c.l.b16 %v88
  %v697 = vunpack.c.h.b16 %v88
  %v698 = vunpack.c.l.b16 %v89
  %v699 = vunpack.c.h.b16 %v89
  %v700 = vunpack.c.l.b16 %v90
  %v701 = vunpack.c.h.b16 %v90
  %v702 = vunpack.c.l.b16 %v91
  %v703 = vunpack.c.h.b16 %v91
  %v704 = vunpack.c.l.b16 %v92
  %v705 = vunpack.c.h.b16 %v92
  %v706 = vunpack.c.l.b16 %v93
  %v707 = vunpack.c.h.b16 %v93
  %v708 = vunpack.c.l.b16 %v94
  %v709 = vunpack.c.h.b16 %v94
  %v710 = vunpack.c.l.b16 %v95
  %v711 = vunpack.c.h.b16 %v95
  %v712 = vunpack.c.l.b16 %v96
  %v713 = vunpack.c.h.b16 %v96
  %v714 = vunpack.c.l.b16 %v97
  %v715 = vunpack.c.h.b16 %v97
  %v716 = vunpack.c.l.b16 %v98
  %v717 = vunpack.c.h.b16 %v98
  %v718 = vunpack.c.l.b16 %v99
  %v719 = vunpack.c.h.b16 %v99
  %v720 = vunpack.c.l.b16 %v100
  %v721 = vunpack.c.h.b16 %v100
  %v722 = vunpack.c.l.b16 %v101
  %v723 = vunpack.c.h.b16 %v101
  %v724 = vunpack.c.l.b16 %v102
  %v725 = vunpack.c.h.b16 %v102
  %v726 = vunpack.c.l.b16 %v103
  %v727 = vunpack.c.h.b16 %v103
  %v728 = vunpack.c.l.b16 %v104
  %v729 = vunpack.c.h.b16 %v104
  %v730 = vunpack.c.l.b16 %v105
  %v731 = vunpack.c.h.b16 %v105
  %v732 = vunpack.c.l.b16 %v106
  %v733 = vunpack.c.h.b16 %v106
  %v734 = vunpack.c.l.b16 %v107
  %v735 = vunpack.c.h.b16 %v107
  %v736 = vunpack.c.l.b16 %v108
  %v737 = vunpack.c.h.b16 %v108
  %v738 = vunpack.c.l.b16 %v109
  %v739 = vunpack.c.h.b16 %v109
  %v740 = vunpack.c.l.b16 %v110
  %v741 = vunpack.c.h.b16 %v110
  %v742 = vunpack.c.l.b16 %v111
  %v743 = vunpack.c.h.b16 %v111
  %v744 = vunpack.c.l.b16 %v112
  %v745 = vunpack.c.h.b16 %v112
  %v746 = vunpack.c.l.b16 %v113
  %v747 = vunpack.c.h.b16 %v113
  %v748 = vunpack.c.l.b16 %v114
  %v749 = vunpack.c.h.b16 %v114
  %v750 = vunpack.c.l.b16 %v115
  %v751 = vunpack.c.h.b16 %v115
  %v752 = vunpack.c.l.b16 %v116
  %v753 = vunpack.c.h.b16 %v116
  %v754 = vunpack.c.l.b16 %v117
  %v755 = vunpack.c.h.b16 %v117
  %v756 = vunpack.c.l.b16 %v118
  %v757 = vunpack.c.h.b16 %v118
  %v758 = vunpack.c.l.b16 %v119
  %v759 = vunpack.c.h.b16 %v119
  %v760 = vunpack.c.l.b16 %v120
  %v761 = vunpack.c.h.b16 %v120
  %v762 = vunpack.c.l.b16 %v121
  %v763 = vunpack.c.h.b16 %v121
  %v764 = vunpack.c.l.b16 %v122
  %v765 = vunpack.c.h.b16 %v122
  %v766 = vunpack.c.l.b16 %v123
  %v767 = vunpack.c.h.b16 %v123
  %v768 = vunpack.c.l.b16 %v124
  %v769 = vunpack.c.h.b16 %v124
  %v770 = vunpack.c.l.b16 %v125
  %v771 = vunpack.c.h.b16 %v125
  %v772 = vunpack.c.l.b16 %v126
  %v773 = vunpack.c.h.b16 %v126
  %v774 = vunpack.c.l.b16 %v127
  %v775 = vunpack.c.h.b16 %v127
  %v776 = vunpack.c.l.b16 %v128
  %v777 = vunpack.c.h.b16 %v128
  %v778 = vunpack.c.l.b16 %v129
  %v779 = vunpack.c.h.b16 %v129
  %v780 = vunpack.c.l.b16 %v130
  %v781 = vunpack.c.h.b16 %v130
  %v782 = vunpack.c.l.b16 %v131
  %v783 = vunpack.c.h.b16 %v131
  %v784 = vunpack.c.l.b16 %v132
  %v785 = vunpack.c.h.b16 %v132
  %v786 = vunpack.c.l.b16 %v133
  %v787 = vunpack.c.h.b16 %v133
  %v788 = vunpack.c.l.b16 %v134
  %v789 = vunpack.c.h.b16 %v134
  %v790 = vunpack.c.l.b16 %v135
  %v791 = vunpack.c.h.b16 %v135
  %v792 = vunpack.c.l.b16 %v136
  %v793 = vunpack.c.h.b16 %v136
  %v794 = vunpack.c.l.b16 %v137
  %v795 = vunpack.c.h.b16 %v137
  %v796 = vunpack.c.l.b16 %v138
  %v797 = vunpack.c.h.b16 %v138
  %v798 = vunpack.c.l.b16 %v139
  %v799 = vunpack.c.h.b16 %v139
  %v800 = vunpack.c.l.b16 %v140
  %v801 = vunpack.c.h.b16 %v140
  %v802 = vunpack.c.l.b16 %v141
  %v803 = vunpack.c.h.b16 %v141
  %v804 = vunpack.c.l.b16 %v142
  %v805 = vunpack.c.h.b16 %v142
  %v806 = vunpack.c.l.b16 %v143
  %v807 = vunpack.c.h.b16 %v143
  %v808 = vunpack.c.l.b16 %v144
  %v809 = vunpack.c.h.b16 %v144
  %v810 = vunpack.c.l.b16 %v145
  %v811 = vunpack.c.h.b16 %v145
  %v812 = vunpack.c.l.b16 %v146
  %v813 = vunpack.c.h.b16 %v146
  %v814 = vunpack.c.l.b16 %v147
  %v815 = vunpack.c.h.b16 %v147
  %v816 = vunpack.c.l.b16 %v148
  %v817 = vunpack.c.h.b16 %v148
  %v818 = vunpack.c.l.b16 %v149
  %v819 = vunpack.c.h.b16 %v149
  %v820 = vunpack.c.l.b16 %v150
  %v821 = vunpack.c.h.b16 %v150
  %v822 = vunpack.c.l.b16 %v151
  %v823 = vunpack.c.h.b16 %v151
  %v824 = vunpack.c.l.b16 %v152
  %v825 = vunpack.c.h.b16 %v152
  %v826 = vunpack.c.l.b16 %v153
  %v827 = vunpack.c.h.b16 %v153
  %v828 = vunpack.c.l.b16 %v154
  %v829 = vunpack.c.h.b16 %v154
  %v830 = vunpack.c.l.b16 %v155
  %v831 = vunpack.c.h.b16 %v155
  %v832 = vunpack.c.l.b16 %v156
  %v833 = vunpack.c.h.b16 %v156
  %v834 = vunpack.c.l.b16 %v157
  %v835 = vunpack.c.h.b16 %v157
  %v836 = vunpack.c.l.b16 %v158
  %v837 = vunpack.c.h.b16 %v158
  %v838 = vunpack.c.l.b16 %v159
  %v839 = vunpack.c.h.b16 %v159
  %v840 = vunpack.c.l.b16 %v160
  %v841 = vunpack.c.h.b16 %v160
  %v842 = vunpack.c.l.b16 %v161
  %v843 = vunpack.c.h.b16 %v161
  %v844 = vunpack.c.l.b16 %v162
  %v845 = vunpack.c.h.b16 %v162
  %v846 = vunpack.c.l.b16 %v163
  %v847 = vunpack.c.h.b16 %v163
  %v848 = vunpack.c.l.b16 %v164
  %v849 = vunpack.c.h.b16 %v164
  %v850 = vunpack.c.l.b16 %v165
  %v851 = vunpack.c.h.b16 %v165
  %v852 = vunpack.c.l.b16 %v166
  %v853 = vunpack.c.h.b16 %v166
  %v854 = vunpack.c.l.b16 %v167
  %v855 = vunpack.c.h.b16 %v167
  %v856 = vunpack.c.l.b16 %v168
  %v857 = vunpack.c.h.b16 %v168
  %v858 = vunpack.c.l.b16 %v169
  %v859 = vunpack.c.h.b16 %v169
  %v860 = vunpack.c.l.b16 %v170
  %v861 = vunpack.c.h.b16 %v170
  %v862 = vunpack.c.l.b16 %v171
  %v863 = vunpack.c.h.b16 %v171
  %v864 = vunpack.c.l.b16 %v172
  %v865 = vunpack.c.h.b16 %v172
  %v866 = vunpack.c.l.b16 %v173
  %v867 = vunpack.c.h.b16 %v173
  %v868 = vunpack.c.l.b16 %v174
  %v869 = vunpack.c.h.b16 %v174
  %v870 = vunpack.c.l.b16 %v175
  %v871 = vunpack.c.h.b16 %v175
  %v872 = vunpack.c.l.b16 %v176
  %v873 = vunpack.c.h.b16 %v176
  %v874 = vunpack.c.l.b16 %v177
  %v875 = vunpack.c.h.b16 %v177
  %v876 = vunpack.c.l.b16 %v178
  %v877 = vunpack.c.h.b16 %v178
  %v878 = vunpack.c.l.b16 %v179
  %v879 = vunpack.c.h.b16 %v179
  %v880 = vunpack.c.l.b16 %v180
  %v881 = vunpack.c.h.b16 %v180
  %v882 = vunpack.c.l.b16 %v181
  %v883 = vunpack.c.h.b16 %v181
  %v884 = vunpack.c.l.b16 %v182
  %v885 = vunpack.c.h.b16 %v182
  %v886 = vunpack.c.l.b16 %v183
  %v887 = vunpack.c.h.b16 %v183
  %v888 = vunpack.c.l.b16 %v184
  %v889 = vunpack.c.h.b16 %v184
  %v890 = vunpack.c.l.b16 %v185
  %v891 = vunpack.c.h.b16 %v185
  %v892 = vunpack.c.l.b16 %v186
  %v893 = vunpack.c.h.b16 %v186
  %v894 = vunpack.c.l.b16 %v187
  %v895 = vunpack.c.h.b16 %v187
  %v896 = vunpack.c.l.b16 %v188
  %v897 = vunpack.c.h.b16 %v188
  %v898 = vunpack.c.l.b16 %v189
  %v899 = vunpack.c.h.b16 %v189
  %v900 = vunpack.c.l.b16 %v190
  %v901 = vunpack.c.h.b16 %v190
  %v902 = vunpack.c.l.b16 %v191
  %v903 = vunpack.c.h.b16 %v191
  %v904 = vunpack.c.l.b16 %v192
  %v905 = vunpack.c.h.b16 %v192
  %v906 = vunpack.c.l.b16 %v193
  %v907 = vunpack.c.h.b16 %v193
  %v908 = vunpack.c.l.b16 %v194
  %v909 = vunpack.c.h.b16 %v194
  %v910 = vunpack.c.l.b16 %v195
  %v911 = vunpack.c.h.b16 %v195
  %v912 = vunpack.c.l.b16 %v196
  %v913 = vunpack.c.h.b16 %v196
  %v914 = vunpack.c.l.b16 %v197
  %v915 = vunpack.c.h.b16 %v197
  %v916 = vunpack.c.l.b16 %v198
  %v917 = vunpack.c.h.b16 %v198
  %v918 = vunpack.c.l.b16 %v199
  %v919 = vunpack.c.h.b16 %v199
  %v920 = vunpack.c.l.b16 %v200
  %v921 = vunpack.c.h.b16 %v200
  %v922 = vunpack.c.l.b16 %v201
  %v923 = vunpack.c.h.b16 %v201
  %v924 = vunpack.c.l.b16 %v202
  %v925 = vunpack.c.h.b16 %v202
  %v926 = vunpack.c.l.b16 %v203
  %v927 = vunpack.c.h.b16 %v203
  %v928 = vunpack.c.l.b16 %v204
  %v929 = vunpack.c.h.b16 %v204
  %v930 = vunpack.c.l.b16 %v205
  %v931 = vunpack.c.h.b16 %v205
  %v932 = vpack.c.b16 %v680, %v676
  %v933 = vpack.c.b16 %v681, %v677
  %v934 = vpack.c.b16 %v682, %v678
  %v935 = vpack.c.b16 %v683, %v679
  %v936 = vpack.c.b16 %v688, %v684
  %v937 = vpack.c.b16 %v689, %v685
  %v938 = vpack.c.b16 %v690, %v686
  %v939 = vpack.c.b16 %v691, %v687
  %v940 = vpack.c.b16 %v696, %v692
  %v941 = vpack.c.b16 %v697, %v693
  %v942 = vpack.c.b16 %v698, %v694
  %v943 = vpack.c.b16 %v699, %v695
  %v944 = vpack.c.b16 %v704, %v700
  %v945 = vpack.c.b16 %v705, %v701
  %v946 = vpack.c.b16 %v706, %v702
  %v947 = vpack.c.b16 %v707, %v703
  %v948 = vpack.c.b16 %v712, %v708
  %v949 = vpack.c.b16 %v713, %v709
  %v950 = vpack.c.b16 %v714, %v710
  %v951 = vpack.c.b16 %v715, %v711
  %v952 = vpack.c.b16 %v720, %v716
  %v953 = vpack.c.b16 %v721, %v717
  %v954 = vpack.c.b16 %v722, %v718
  %v955 = vpack.c.b16 %v723, %v719
  %v956 = vpack.c.b16 %v728, %v724
  %v957 = vpack.c.b16 %v729, %v725
  %v958 = vpack.c.b16 %v730, %v726
  %v959 = vpack.c.b16 %v731, %v727
  %v960 = vpack.c.b16 %v736, %v732
  %v961 = vpack.c.b16 %v737, %v733
  %v962 = vpack.c.b16 %v738, %v734
  %v963 = vpack.c.b16 %v739, %v735
  %v964 = vpack.c.b16 %v744, %v740
  %v965 = vpack.c.b16 %v745, %v741
  %v966 = vpack.c.b16 %v746, %v742
  %v967 = vpack.c.b16 %v747, %v743
  %v968 = vpack.c.b16 %v752, %v748
  %v969 = vpack.c.b16 %v753, %v749
  %v970 = vpack.c.b16 %v754, %v750
  %v971 = vpack.c.b16 %v755, %v751
  %v972 = vpack.c.b16 %v760, %v756
  %v973 = vpack.c.b16 %v761, %v757
  %v974 = vpack.c.b16 %v762, %v758
  %v975 = vpack.c.b16 %v763, %v759
  %v976 = vpack.c.b16 %v768, %v764
  %v977 = vpack.c.b16 %v769, %v765
  %v978 = vpack.c.b16 %v770, %v766
  %v979 = vpack.c.b16 %v771, %v767
  %v980 = vpack.c.b16 %v776, %v772
  %v981 = vpack.c.b16 %v777, %v773
  %v982 = vpack.c.b16 %v778, %v774
  %v983 = vpack.c.b16 %v779, %v775
  %v984 = vpack.c.b16 %v784, %v780
  %v985 = vpack.c.b16 %v785, %v781
  %v986 = vpack.c.b16 %v786, %v782
  %v987 = vpack.c.b16 %v787, %v783
  %v988 = vpack.c.b16 %v792, %v788
  %v989 = vpack.c.b16 %v793, %v789
  %v990 = vpack.c.b16 %v794, %v790
  %v991 = vpack.c.b16 %v795, %v791
  %v992 = vpack.c.b16 %v800, %v796
  %v993 = vpack.c.b16 %v801, %v797
  %v994 = vpack.c.b16 %v802, %v798
  %v995 = vpack.c.b16 %v803, %v799
  %v996 = vpack.c.b16 %v808, %v804
  %v997 = vpack.c.b16 %v809, %v805
  %v998 = vpack.c.b16 %v810, %v806
  %v999 = vpack.c.b16 %v811, %v807
  %v1000 = vpack.c.b16 %v816, %v812
  %v1001 = vpack.c.b16 %v817, %v813
  %v1002 = vpack.c.b16 %v818, %v814
  %v1003 = vpack.c.b16 %v819, %v815
  %v1004 = vpack.c.b16 %v824, %v820
  %v1005 = vpack.c.b16 %v825, %v821
  %v1006 = vpack.c.b16 %v826, %v822
  %v1007 = vpack.c.b16 %v827, %v823
  %v1008 = vpack.c.b16 %v832, %v828
  %v1009 = vpack.c.b16 %v833, %v829
  %v1010 = vpack.c.b16 %v834, %v830
  %v1011 = vpack.c.b16 %v835, %v831
  %v1012 = vpack.c.b16 %v840, %v836
  %v1013 = vpack.c.b16 %v841, %v837
  %v1014 = vpack.c.b16 %v842, %v838
  %v1015 = vpack.c.b16 %v843, %v839
  %v1016 = vpack.c.b16 %v848, %v844
  %v1017 = vpack.c.b16 %v849, %v845
  %v1018 = vpack.c.b16 %v850, %v846
  %v1019 = vpack.c.b16 %v851, %v847
  %v1020 = vpack.c.b16 %v856, %v852
  %v1021 = vpack.c.b16 %v857, %v853
  %v1022 = vpack.c.b16 %v858, %v854
  %v1023 = vpack.c.b16 %v859, %v855
  %v1024 = vpack.c.b16 %v864, %v860
  %v1025 = vpack.c.b16 %v865, %v861
  %v1026 = vpack.c.b16 %v866, %v862
  %v1027 = vpack.c.b16 %v867, %v863
  %v1028 = vpack.c.b16 %v872, %v868
  %v1029 = vpack.c.b16 %v873, %v869
  %v1030 = vpack.c.b16 %v874, %v870
  %v1031 = vpack.c.b16 %v875, %v871
  %v1032 = vpack.c.b16 %v880, %v876
  %v1033 = vpack.c.b16 %v881, %v877
  %v1034 = vpack.c.b16 %v882, %v878
  %v1035 = vpack.c.b16 %v883, %v879
  %v1036 = vpack.c.b16 %v888, %v884
  %v1037 = vpack.c.b16 %v889, %v885
  %v1038 = vpack.c.b16 %v890, %v886
  %v1039 = vpack.c.b16 %v891, %v887
  %v1040 = vpack.c.b16 %v896, %v892
  %v1041 = vpack.c.b16 %v897, %v893
  %v1042 = vpack.c.b16 %v898, %v894
  %v1043 = vpack.c.b16 %v899, %v895
  %v1044 = vpack.c.b16 %v904, %v900
  %v1045 = vpack.c.b16 %v905, %v901
  %v1046 = vpack.c.b16 %v906, %v902
  %v1047 = vpack.c.b16 %v907, %v903
  %v1048 = vpack.c.b16 %v912, %v908
  %v1049 = vpack.c.b16 %v913, %v909
  %v1050 = vpack.c.b16 %v914, %v910
  %v1051 = vpack.c.b16 %v915, %v911
  %v1052 = vpack.c.b16 %v920, %v916
  %v1053 = vpack.c.b16 %v921, %v917
  %v1054 = vpack.c.b16 %v922, %v918
  %v1055 = vpack.c.b16 %v923, %v919
  %v1056 = vpack.c.b16 %v928, %v924
  %v1057 = vpack.c.b16 %v929, %v925
  %v1058 = vpack.c.b16 %v930, %v926
  %v1059 = vpack.c.b16 %v931, %v927
  %1188 = vmatprep.subr.bf16.mxu0 %v933
  %1189 = vmatpush1.bf16.msra.mxu0 %v932
  %1190 = vmatprep.subr.bf16.mxu0 %v937
  %1191 = vmatpush1.bf16.msra.mxu0 %v936
  %1192 = vmatprep.subr.bf16.mxu0 %v941
  %1193 = vmatpush1.bf16.msra.mxu0 %v940
  %1194 = vmatprep.subr.bf16.mxu0 %v945
  %1195 = vmatpush1.bf16.msra.mxu0 %v944
  %1196 = vmatprep.subr.bf16.mxu0 %v949
  %1197 = vmatpush1.bf16.msra.mxu0 %v948
  %1198 = vmatprep.subr.bf16.mxu0 %v953
  %1199 = vmatpush1.bf16.msra.mxu0 %v952
  %1200 = vmatprep.subr.bf16.mxu0 %v957
  %1201 = vmatpush1.bf16.msra.mxu0 %v956
  %1202 = vmatprep.subr.bf16.mxu0 %v961
  %1203 = vmatpush1.bf16.msra.mxu0 %v960
  %1204 = vmatprep.subr.bf16.mxu0 %v965
  %1205 = vmatpush1.bf16.msra.mxu0 %v964
  %1206 = vmatprep.subr.bf16.mxu0 %v969
  %1207 = vmatpush1.bf16.msra.mxu0 %v968
  %1208 = vmatprep.subr.bf16.mxu0 %v973
  %1209 = vmatpush1.bf16.msra.mxu0 %v972
  %1210 = vmatprep.subr.bf16.mxu0 %v977
  %1211 = vmatpush1.bf16.msra.mxu0 %v976
  %1212 = vmatprep.subr.bf16.mxu0 %v981
  %1213 = vmatpush1.bf16.msra.mxu0 %v980
  %1214 = vmatprep.subr.bf16.mxu0 %v985
  %1215 = vmatpush1.bf16.msra.mxu0 %v984
  %1216 = vmatprep.subr.bf16.mxu0 %v989
  %1217 = vmatpush1.bf16.msra.mxu0 %v988
  %1218 = vmatprep.subr.bf16.mxu0 %v993
  %1219 = vmatpush1.bf16.msra.mxu0 %v992
  %1220 = vmatprep.mubr.bf16.mxu0 %v421
  %1221 = vmatmul.mubr.bf16.gmra.mrb[0].mxu0 %v420
  %v1222 = vpop.f32.mrb[0].mxu0
  %v1223 = vadd.f32 %v211, %v1222
  %v1224 = vpop.f32.mrb[0].mxu0
  %v1225 = vadd.f32 %v215, %v1224
  %v1226 = vpop.f32.mrb[0].mxu0
  %v1227 = vadd.f32 %v211, %v1226
  %v1228 = vpop.f32.mrb[0].mxu0
  %v1229 = vadd.f32 %v215, %v1228
  %1230 = vmatprep.mubr.bf16.mxu0 %v425
  %1231 = vmatmul.mubr.bf16.gmra.mrb[0].mxu0 %v424
  %v1232 = vpop.f32.mrb[0].mxu0
  %v1233 = vadd.f32 %v211, %v1232
  %v1234 = vpop.f32.mrb[0].mxu0
  %v1235 = vadd.f32 %v215, %v1234
  %v1236 = vpop.f32.mrb[0].mxu0
  %v1237 = vadd.f32 %v211, %v1236
  %v1238 = vpop.f32.mrb[0].mxu0
  %v1239 = vadd.f32 %v215, %v1238
  %1240 = vmatprep.mubr.bf16.mxu0 %v429
  %1241 = vmatmul.mubr.bf16.gmra.mrb[0].mxu0 %v428
  %v1242 = vpop.f32.mrb[0].mxu0
  %v1243 = vadd.f32 %v211, %v1242
  %v1244 = vpop.f32.mrb[0].mxu0
  %v1245 = vadd.f32 %v215, %v1244
  %v1246 = vpop.f32.mrb[0].mxu0
  %v1247 = vadd.f32 %v211, %v1246
  %v1248 = vpop.f32.mrb[0].mxu0
  %v1249 = vadd.f32 %v215, %v1248
  %1250 = vmatprep.mubr.bf16.mxu0 %v433
  %1251 = vmatmul.mubr.bf16.gmra.mrb[0].mxu0 %v432
  %v1252 = vpop.f32.mrb[0].mxu0
  %v1253 = vadd.f32 %v211, %v1252
  %v1254 = vpop.f32.mrb[0].mxu0
  %v1255 = vadd.f32 %v215, %v1254
  %v1256 = vpop.f32.mrb[0].mxu0
  %v1257 = vadd.f32 %v211, %v1256
  %v1258 = vpop.f32.mrb[0].mxu0
  %v1259 = vadd.f32 %v215, %v1258
  %1260 = vmatprep.mubr.bf16.mxu0 %v437
  %1261 = vmatmul.mubr.bf16.gmra.mrb[0].mxu0 %v436
  %v1262 = vpop.f32.mrb[0].mxu0
  %v1263 = vadd.f32 %v211, %v1262
  %v1264 = vpop.f32.mrb[0].mxu0
  %v1265 = vadd.f32 %v215, %v1264
  %v1266 = vpop.f32.mrb[0].mxu0
  %v1267 = vadd.f32 %v211, %v1266
  %v1268 = vpop.f32.mrb[0].mxu0
  %v1269 = vadd.f32 %v215, %v1268
  %1270 = vmatprep.mubr.bf16.mxu0 %v441
  %1271 = vmatmul.mubr.bf16.gmra.mrb[0].mxu0 %v440
  %v1272 = vpop.f32.mrb[0].mxu0
  %v1273 = vadd.f32 %v211, %v1272
  %v1274 = vpop.f32.mrb[0].mxu0
  %v1275 = vadd.f32 %v215, %v1274
  %v1276 = vpop.f32.mrb[0].mxu0
  %v1277 = vadd.f32 %v211, %v1276
  %v1278 = vpop.f32.mrb[0].mxu0
  %v1279 = vadd.f32 %v215, %v1278
  %1280 = vmatprep.mubr.bf16.mxu0 %v445
  %1281 = vmatmul.mubr.bf16.gmra.mrb[0].mxu0 %v444
  %v1282 = vpop.f32.mrb[0].mxu0
  %v1283 = vadd.f32 %v211, %v1282
  %v1284 = vpop.f32.mrb[0].mxu0
  %v1285 = vadd.f32 %v215, %v1284
  %v1286 = vpop.f32.mrb[0].mxu0
  %v1287 = vadd.f32 %v211, %v1286
  %v1288 = vpop.f32.mrb[0].mxu0
  %v1289 = vadd.f32 %v215, %v1288
  %1290 = vmatprep.mubr.bf16.mxu0 %v449
  %1291 = vmatmul.mubr.bf16.gmra.mrb[0].mxu0 %v448
  %v1292 = vpop.f32.mrb[0].mxu0
  %v1293 = vadd.f32 %v211, %v1292
  %v1294 = vpop.f32.mrb[0].mxu0
  %v1295 = vadd.f32 %v215, %v1294
  %v1296 = vpop.f32.mrb[0].mxu0
  %v1297 = vadd.f32 %v211, %v1296
  %v1298 = vpop.f32.mrb[0].mxu0
  %v1299 = vadd.f32 %v215, %v1298
  %1300 = vmatprep.mubr.bf16.mxu0 %v453
  %1301 = vmatmul.mubr.bf16.gmra.mrb[0].mxu0 %v452
  %v1302 = vpop.f32.mrb[0].mxu0
  %v1303 = vadd.f32 %v211, %v1302
  %v1304 = vpop.f32.mrb[0].mxu0
  %v1305 = vadd.f32 %v215, %v1304
  %v1306 = vpop.f32.mrb[0].mxu0
  %v1307 = vadd.f32 %v211, %v1306
  %v1308 = vpop.f32.mrb[0].mxu0
  %v1309 = vadd.f32 %v215, %v1308
  %1310 = vmatprep.mubr.bf16.mxu0 %v457
  %1311 = vmatmul.mubr.bf16.gmra.mrb[0].mxu0 %v456
  %v1312 = vpop.f32.mrb[0].mxu0
  %v1313 = vadd.f32 %v211, %v1312
  %v1314 = vpop.f32.mrb[0].mxu0
  %v1315 = vadd.f32 %v215, %v1314
  %v1316 = vpop.f32.mrb[0].mxu0
  %v1317 = vadd.f32 %v211, %v1316
  %v1318 = vpop.f32.mrb[0].mxu0
  %v1319 = vadd.f32 %v215, %v1318
  %1320 = vmatprep.mubr.bf16.mxu0 %v461
  %1321 = vmatmul.mubr.bf16.gmra.mrb[0].mxu0 %v460
  %v1322 = vpop.f32.mrb[0].mxu0
  %v1323 = vadd.f32 %v211, %v1322
  %v1324 = vpop.f32.mrb[0].mxu0
  %v1325 = vadd.f32 %v215, %v1324
  %v1326 = vpop.f32.mrb[0].mxu0
  %v1327 = vadd.f32 %v211, %v1326
  %v1328 = vpop.f32.mrb[0].mxu0
  %v1329 = vadd.f32 %v215, %v1328
  %1330 = vmatprep.mubr.bf16.mxu0 %v465
  %1331 = vmatmul.mubr.bf16.gmra.mrb[0].mxu0 %v464
  %v1332 = vpop.f32.mrb[0].mxu0
  %v1333 = vadd.f32 %v211, %v1332
  %v1334 = vpop.f32.mrb[0].mxu0
  %v1335 = vadd.f32 %v215, %v1334
  %v1336 = vpop.f32.mrb[0].mxu0
  %v1337 = vadd.f32 %v211, %v1336
  %v1338 = vpop.f32.mrb[0].mxu0
  %v1339 = vadd.f32 %v215, %v1338
  %1340 = vmatprep.mubr.bf16.mxu0 %v469
  %1341 = vmatmul.mubr.bf16.gmra.mrb[0].mxu0 %v468
  %v1342 = vpop.f32.mrb[0].mxu0
  %v1343 = vadd.f32 %v211, %v1342
  %v1344 = vpop.f32.mrb[0].mxu0
  %v1345 = vadd.f32 %v215, %v1344
  %v1346 = vpop.f32.mrb[0].mxu0
  %v1347 = vadd.f32 %v211, %v1346
  %v1348 = vpop.f32.mrb[0].mxu0
  %v1349 = vadd.f32 %v215, %v1348
  %1350 = vmatprep.mubr.bf16.mxu0 %v473
  %1351 = vmatmul.mubr.bf16.gmra.mrb[0].mxu0 %v472
  %v1352 = vpop.f32.mrb[0].mxu0
  %v1353 = vadd.f32 %v211, %v1352
  %v1354 = vpop.f32.mrb[0].mxu0
  %v1355 = vadd.f32 %v215, %v1354
  %v1356 = vpop.f32.mrb[0].mxu0
  %v1357 = vadd.f32 %v211, %v1356
  %v1358 = vpop.f32.mrb[0].mxu0
  %v1359 = vadd.f32 %v215, %v1358
  %1360 = vmatprep.mubr.bf16.mxu0 %v477
  %1361 = vmatmul.mubr.bf16.gmra.mrb[0].mxu0 %v476
  %v1362 = vpop.f32.mrb[0].mxu0
  %v1363 = vadd.f32 %v211, %v1362
  %v1364 = vpop.f32.mrb[0].mxu0
  %v1365 = vadd.f32 %v215, %v1364
  %v1366 = vpop.f32.mrb[0].mxu0
  %v1367 = vadd.f32 %v211, %v1366
  %v1368 = vpop.f32.mrb[0].mxu0
  %v1369 = vadd.f32 %v215, %v1368
  %1370 = vmatprep.mubr.bf16.mxu0 %v481
  %1371 = vmatmul.mubr.bf16.gmra.mrb[0].mxu0 %v480
  %v1372 = vpop.f32.mrb[0].mxu0
  %v1373 = vadd.f32 %v211, %v1372
  %v1374 = vpop.f32.mrb[0].mxu0
  %v1375 = vadd.f32 %v215, %v1374
  %v1376 = vpop.f32.mrb[0].mxu0
  %v1377 = vadd.f32 %v211, %v1376
  %v1378 = vpop.f32.mrb[0].mxu0
  %v1379 = vadd.f32 %v215, %v1378
  %1380 = vdwg.mxu0
  %1381 = vmatprep.subr.bf16.mxu0 %v997
  %1382 = vmatpush1.bf16.msra.mxu0 %v996
  %1383 = vmatprep.subr.bf16.mxu0 %v1001
  %1384 = vmatpush1.bf16.msra.mxu0 %v1000
  %1385 = vmatprep.subr.bf16.mxu0 %v1005
  %1386 = vmatpush1.bf16.msra.mxu0 %v1004
  %1387 = vmatprep.subr.bf16.mxu0 %v1009
  %1388 = vmatpush1.bf16.msra.mxu0 %v1008
  %1389 = vmatprep.subr.bf16.mxu0 %v1013
  %1390 = vmatpush1.bf16.msra.mxu0 %v1012
  %1391 = vmatprep.subr.bf16.mxu0 %v1017
  %1392 = vmatpush1.bf16.msra.mxu0 %v1016
  %1393 = vmatprep.subr.bf16.mxu0 %v1021
  %1394 = vmatpush1.bf16.msra.mxu0 %v1020
  %1395 = vmatprep.subr.bf16.mxu0 %v1025
  %1396 = vmatpush1.bf16.msra.mxu0 %v1024
  %1397 = vmatprep.subr.bf16.mxu0 %v1029
  %1398 = vmatpush1.bf16.msra.mxu0 %v1028
  %1399 = vmatprep.subr.bf16.mxu0 %v1033
  %1400 = vmatpush1.bf16.msra.mxu0 %v1032
  %1401 = vmatprep.subr.bf16.mxu0 %v1037
  %1402 = vmatpush1.bf16.msra.mxu0 %v1036
  %1403 = vmatprep.subr.bf16.mxu0 %v1041
  %1404 = vmatpush1.bf16.msra.mxu0 %v1040
  %1405 = vmatprep.subr.bf16.mxu0 %v1045
  %1406 = vmatpush1.bf16.msra.mxu0 %v1044
  %1407 = vmatprep.subr.bf16.mxu0 %v1049
  %1408 = vmatpush1.bf16.msra.mxu0 %v1048
  %1409 = vmatprep.subr.bf16.mxu0 %v1053
  %1410 = vmatpush1.bf16.msra.mxu0 %v1052
  %1411 = vmatprep.subr.bf16.mxu0 %v1057
  %1412 = vmatpush1.bf16.msra.mxu0 %v1056
  %1413 = vmatprep.mubr.bf16.mxu0 %v423
  %1414 = vmatmul.mubr.bf16.gmra.mrb[0].mxu0 %v422
  %v1415 = vpop.f32.mrb[0].mxu0
  %v1416 = vadd.f32 %v1223, %v1415
  %v1417 = vpop.f32.mrb[0].mxu0
  %v1418 = vadd.f32 %v1225, %v1417
  %v1419 = vpop.f32.mrb[0].mxu0
  %v1420 = vadd.f32 %v1227, %v1419
  %v1421 = vpop.f32.mrb[0].mxu0
  %v1422 = vadd.f32 %v1229, %v1421
  %1423 = vmatprep.mubr.bf16.mxu0 %v427
  %1424 = vmatmul.mubr.bf16.gmra.mrb[0].mxu0 %v426
  %v1425 = vpop.f32.mrb[0].mxu0
  %v1426 = vadd.f32 %v1233, %v1425
  %v1427 = vpop.f32.mrb[0].mxu0
  %v1428 = vadd.f32 %v1235, %v1427
  %v1429 = vpop.f32.mrb[0].mxu0
  %v1430 = vadd.f32 %v1237, %v1429
  %v1431 = vpop.f32.mrb[0].mxu0
  %v1432 = vadd.f32 %v1239, %v1431
  %1433 = vmatprep.mubr.bf16.mxu0 %v431
  %1434 = vmatmul.mubr.bf16.gmra.mrb[0].mxu0 %v430
  %v1435 = vpop.f32.mrb[0].mxu0
  %v1436 = vadd.f32 %v1243, %v1435
  %v1437 = vpop.f32.mrb[0].mxu0
  %v1438 = vadd.f32 %v1245, %v1437
  %v1439 = vpop.f32.mrb[0].mxu0
  %v1440 = vadd.f32 %v1247, %v1439
  %v1441 = vpop.f32.mrb[0].mxu0
  %v1442 = vadd.f32 %v1249, %v1441
  %1443 = vmatprep.mubr.bf16.mxu0 %v435
  %1444 = vmatmul.mubr.bf16.gmra.mrb[0].mxu0 %v434
  %v1445 = vpop.f32.mrb[0].mxu0
  %v1446 = vadd.f32 %v1253, %v1445
  %v1447 = vpop.f32.mrb[0].mxu0
  %v1448 = vadd.f32 %v1255, %v1447
  %v1449 = vpop.f32.mrb[0].mxu0
  %v1450 = vadd.f32 %v1257, %v1449
  %v1451 = vpop.f32.mrb[0].mxu0
  %v1452 = vadd.f32 %v1259, %v1451
  %1453 = vmatprep.mubr.bf16.mxu0 %v439
  %1454 = vmatmul.mubr.bf16.gmra.mrb[0].mxu0 %v438
  %v1455 = vpop.f32.mrb[0].mxu0
  %v1456 = vadd.f32 %v1263, %v1455
  %v1457 = vpop.f32.mrb[0].mxu0
  %v1458 = vadd.f32 %v1265, %v1457
  %v1459 = vpop.f32.mrb[0].mxu0
  %v1460 = vadd.f32 %v1267, %v1459
  %v1461 = vpop.f32.mrb[0].mxu0
  %v1462 = vadd.f32 %v1269, %v1461
  %1463 = vmatprep.mubr.bf16.mxu0 %v443
  %1464 = vmatmul.mubr.bf16.gmra.mrb[0].mxu0 %v442
  %v1465 = vpop.f32.mrb[0].mxu0
  %v1466 = vadd.f32 %v1273, %v1465
  %v1467 = vpop.f32.mrb[0].mxu0
  %v1468 = vadd.f32 %v1275, %v1467
  %v1469 = vpop.f32.mrb[0].mxu0
  %v1470 = vadd.f32 %v1277, %v1469
  %v1471 = vpop.f32.mrb[0].mxu0
  %v1472 = vadd.f32 %v1279, %v1471
  %1473 = vmatprep.mubr.bf16.mxu0 %v447
  %1474 = vmatmul.mubr.bf16.gmra.mrb[0].mxu0 %v446
  %v1475 = vpop.f32.mrb[0].mxu0
  %v1476 = vadd.f32 %v1283, %v1475
  %v1477 = vpop.f32.mrb[0].mxu0
  %v1478 = vadd.f32 %v1285, %v1477
  %v1479 = vpop.f32.mrb[0].mxu0
  %v1480 = vadd.f32 %v1287, %v1479
  %v1481 = vpop.f32.mrb[0].mxu0
  %v1482 = vadd.f32 %v1289, %v1481
  %1483 = vmatprep.mubr.bf16.mxu0 %v451
  %1484 = vmatmul.mubr.bf16.gmra.mrb[0].mxu0 %v450
  %v1485 = vpop.f32.mrb[0].mxu0
  %v1486 = vadd.f32 %v1293, %v1485
  %v1487 = vpop.f32.mrb[0].mxu0
  %v1488 = vadd.f32 %v1295, %v1487
  %v1489 = vpop.f32.mrb[0].mxu0
  %v1490 = vadd.f32 %v1297, %v1489
  %v1491 = vpop.f32.mrb[0].mxu0
  %v1492 = vadd.f32 %v1299, %v1491
  %1493 = vmatprep.mubr.bf16.mxu0 %v455
  %1494 = vmatmul.mubr.bf16.gmra.mrb[0].mxu0 %v454
  %v1495 = vpop.f32.mrb[0].mxu0
  %v1496 = vadd.f32 %v1303, %v1495
  %v1497 = vpop.f32.mrb[0].mxu0
  %v1498 = vadd.f32 %v1305, %v1497
  %v1499 = vpop.f32.mrb[0].mxu0
  %v1500 = vadd.f32 %v1307, %v1499
  %v1501 = vpop.f32.mrb[0].mxu0
  %v1502 = vadd.f32 %v1309, %v1501
  %1503 = vmatprep.mubr.bf16.mxu0 %v459
  %1504 = vmatmul.mubr.bf16.gmra.mrb[0].mxu0 %v458
  %v1505 = vpop.f32.mrb[0].mxu0
  %v1506 = vadd.f32 %v1313, %v1505
  %v1507 = vpop.f32.mrb[0].mxu0
  %v1508 = vadd.f32 %v1315, %v1507
  %v1509 = vpop.f32.mrb[0].mxu0
  %v1510 = vadd.f32 %v1317, %v1509
  %v1511 = vpop.f32.mrb[0].mxu0
  %v1512 = vadd.f32 %v1319, %v1511
  %1513 = vmatprep.mubr.bf16.mxu0 %v463
  %1514 = vmatmul.mubr.bf16.gmra.mrb[0].mxu0 %v462
  %v1515 = vpop.f32.mrb[0].mxu0
  %v1516 = vadd.f32 %v1323, %v1515
  %v1517 = vpop.f32.mrb[0].mxu0
  %v1518 = vadd.f32 %v1325, %v1517
  %v1519 = vpop.f32.mrb[0].mxu0
  %v1520 = vadd.f32 %v1327, %v1519
  %v1521 = vpop.f32.mrb[0].mxu0
  %v1522 = vadd.f32 %v1329, %v1521
  %1523 = vmatprep.mubr.bf16.mxu0 %v467
  %1524 = vmatmul.mubr.bf16.gmra.mrb[0].mxu0 %v466
  %v1525 = vpop.f32.mrb[0].mxu0
  %v1526 = vadd.f32 %v1333, %v1525
  %v1527 = vpop.f32.mrb[0].mxu0
  %v1528 = vadd.f32 %v1335, %v1527
  %v1529 = vpop.f32.mrb[0].mxu0
  %v1530 = vadd.f32 %v1337, %v1529
  %v1531 = vpop.f32.mrb[0].mxu0
  %v1532 = vadd.f32 %v1339, %v1531
  %1533 = vmatprep.mubr.bf16.mxu0 %v471
  %1534 = vmatmul.mubr.bf16.gmra.mrb[0].mxu0 %v470
  %v1535 = vpop.f32.mrb[0].mxu0
  %v1536 = vadd.f32 %v1343, %v1535
  %v1537 = vpop.f32.mrb[0].mxu0
  %v1538 = vadd.f32 %v1345, %v1537
  %v1539 = vpop.f32.mrb[0].mxu0
  %v1540 = vadd.f32 %v1347, %v1539
  %v1541 = vpop.f32.mrb[0].mxu0
  %v1542 = vadd.f32 %v1349, %v1541
  %1543 = vmatprep.mubr.bf16.mxu0 %v475
  %1544 = vmatmul.mubr.bf16.gmra.mrb[0].mxu0 %v474
  %v1545 = vpop.f32.mrb[0].mxu0
  %v1546 = vadd.f32 %v1353, %v1545
  %v1547 = vpop.f32.mrb[0].mxu0
  %v1548 = vadd.f32 %v1355, %v1547
  %v1549 = vpop.f32.mrb[0].mxu0
  %v1550 = vadd.f32 %v1357, %v1549
  %v1551 = vpop.f32.mrb[0].mxu0
  %v1552 = vadd.f32 %v1359, %v1551
  %1553 = vmatprep.mubr.bf16.mxu0 %v479
  %1554 = vmatmul.mubr.bf16.gmra.mrb[0].mxu0 %v478
  %v1555 = vpop.f32.mrb[0].mxu0
  %v1556 = vadd.f32 %v1363, %v1555
  %v1557 = vpop.f32.mrb[0].mxu0
  %v1558 = vadd.f32 %v1365, %v1557
  %v1559 = vpop.f32.mrb[0].mxu0
  %v1560 = vadd.f32 %v1367, %v1559
  %v1561 = vpop.f32.mrb[0].mxu0
  %v1562 = vadd.f32 %v1369, %v1561
  %1563 = vmatprep.mubr.bf16.mxu0 %v483
  %1564 = vmatmul.mubr.bf16.gmra.mrb[0].mxu0 %v482
  %v1565 = vpop.f32.mrb[0].mxu0
  %v1566 = vadd.f32 %v1373, %v1565
  %v1567 = vpop.f32.mrb[0].mxu0
  %v1568 = vadd.f32 %v1375, %v1567
  %v1569 = vpop.f32.mrb[0].mxu0
  %v1570 = vadd.f32 %v1377, %v1569
  %v1571 = vpop.f32.mrb[0].mxu0
  %v1572 = vadd.f32 %v1379, %v1571
  %1573 = vdwg.mxu0
  %1574 = vmatprep.subr.bf16.mxu0 %v935
  %1575 = vmatpush1.bf16.msra.mxu0 %v934
  %1576 = vmatprep.subr.bf16.mxu0 %v939
  %1577 = vmatpush1.bf16.msra.mxu0 %v938
  %1578 = vmatprep.subr.bf16.mxu0 %v943
  %1579 = vmatpush1.bf16.msra.mxu0 %v942
  %1580 = vmatprep.subr.bf16.mxu0 %v947
  %1581 = vmatpush1.bf16.msra.mxu0 %v946
  %1582 = vmatprep.subr.bf16.mxu0 %v951
  %1583 = vmatpush1.bf16.msra.mxu0 %v950
  %1584 = vmatprep.subr.bf16.mxu0 %v955
  %1585 = vmatpush1.bf16.msra.mxu0 %v954
  %1586 = vmatprep.subr.bf16.mxu0 %v959
  %1587 = vmatpush1.bf16.msra.mxu0 %v958
  %1588 = vmatprep.subr.bf16.mxu0 %v963
  %1589 = vmatpush1.bf16.msra.mxu0 %v962
  %1590 = vmatprep.subr.bf16.mxu0 %v967
  %1591 = vmatpush1.bf16.msra.mxu0 %v966
  %1592 = vmatprep.subr.bf16.mxu0 %v971
  %1593 = vmatpush1.bf16.msra.mxu0 %v970
  %1594 = vmatprep.subr.bf16.mxu0 %v975
  %1595 = vmatpush1.bf16.msra.mxu0 %v974
  %1596 = vmatprep.subr.bf16.mxu0 %v979
  %1597 = vmatpush1.bf16.msra.mxu0 %v978
  %1598 = vmatprep.subr.bf16.mxu0 %v983
  %1599 = vmatpush1.bf16.msra.mxu0 %v982
  %1600 = vmatprep.subr.bf16.mxu0 %v987
  %1601 = vmatpush1.bf16.msra.mxu0 %v986
  %1602 = vmatprep.subr.bf16.mxu0 %v991
  %1603 = vmatpush1.bf16.msra.mxu0 %v990
  %1604 = vmatprep.subr.bf16.mxu0 %v995
  %1605 = vmatpush1.bf16.msra.mxu0 %v994
  %1606 = vmatprep.mubr.bf16.mxu0 %v421
  %1607 = vmatmul.mubr.bf16.gmra.mrb[0].mxu0 %v420
  %v1608 = vpop.f32.mrb[0].mxu0
  %v1609 = vadd.f32 %v219, %v1608
  %v1610 = vpop.f32.mrb[0].mxu0
  %v1611 = vadd.f32 %v223, %v1610
  %v1612 = vpop.f32.mrb[0].mxu0
  %v1613 = vadd.f32 %v219, %v1612
  %v1614 = vpop.f32.mrb[0].mxu0
  %v1615 = vadd.f32 %v223, %v1614
  %1616 = vmatprep.mubr.bf16.mxu0 %v425
  %1617 = vmatmul.mubr.bf16.gmra.mrb[0].mxu0 %v424
  %v1618 = vpop.f32.mrb[0].mxu0
  %v1619 = vadd.f32 %v219, %v1618
  %v1620 = vpop.f32.mrb[0].mxu0
  %v1621 = vadd.f32 %v223, %v1620
  %v1622 = vpop.f32.mrb[0].mxu0
  %v1623 = vadd.f32 %v219, %v1622
  %v1624 = vpop.f32.mrb[0].mxu0
  %v1625 = vadd.f32 %v223, %v1624
  %1626 = vmatprep.mubr.bf16.mxu0 %v429
  %1627 = vmatmul.mubr.bf16.gmra.mrb[0].mxu0 %v428
  %v1628 = vpop.f32.mrb[0].mxu0
  %v1629 = vadd.f32 %v219, %v1628
  %v1630 = vpop.f32.mrb[0].mxu0
  %v1631 = vadd.f32 %v223, %v1630
  %v1632 = vpop.f32.mrb[0].mxu0
  %v1633 = vadd.f32 %v219, %v1632
  %v1634 = vpop.f32.mrb[0].mxu0
  %v1635 = vadd.f32 %v223, %v1634
  %1636 = vmatprep.mubr.bf16.mxu0 %v433
  %1637 = vmatmul.mubr.bf16.gmra.mrb[0].mxu0 %v432
  %v1638 = vpop.f32.mrb[0].mxu0
  %v1639 = vadd.f32 %v219, %v1638
  %v1640 = vpop.f32.mrb[0].mxu0
  %v1641 = vadd.f32 %v223, %v1640
  %v1642 = vpop.f32.mrb[0].mxu0
  %v1643 = vadd.f32 %v219, %v1642
  %v1644 = vpop.f32.mrb[0].mxu0
  %v1645 = vadd.f32 %v223, %v1644
  %1646 = vmatprep.mubr.bf16.mxu0 %v437
  %1647 = vmatmul.mubr.bf16.gmra.mrb[0].mxu0 %v436
  %v1648 = vpop.f32.mrb[0].mxu0
  %v1649 = vadd.f32 %v219, %v1648
  %v1650 = vpop.f32.mrb[0].mxu0
  %v1651 = vadd.f32 %v223, %v1650
  %v1652 = vpop.f32.mrb[0].mxu0
  %v1653 = vadd.f32 %v219, %v1652
  %v1654 = vpop.f32.mrb[0].mxu0
  %v1655 = vadd.f32 %v223, %v1654
  %1656 = vmatprep.mubr.bf16.mxu0 %v441
  %1657 = vmatmul.mubr.bf16.gmra.mrb[0].mxu0 %v440
  %v1658 = vpop.f32.mrb[0].mxu0
  %v1659 = vadd.f32 %v219, %v1658
  %v1660 = vpop.f32.mrb[0].mxu0
  %v1661 = vadd.f32 %v223, %v1660
  %v1662 = vpop.f32.mrb[0].mxu0
  %v1663 = vadd.f32 %v219, %v1662
  %v1664 = vpop.f32.mrb[0].mxu0
  %v1665 = vadd.f32 %v223, %v1664
  %1666 = vmatprep.mubr.bf16.mxu0 %v445
  %1667 = vmatmul.mubr.bf16.gmra.mrb[0].mxu0 %v444
  %v1668 = vpop.f32.mrb[0].mxu0
  %v1669 = vadd.f32 %v219, %v1668
  %v1670 = vpop.f32.mrb[0].mxu0
  %v1671 = vadd.f32 %v223, %v1670
  %v1672 = vpop.f32.mrb[0].mxu0
  %v1673 = vadd.f32 %v219, %v1672
  %v1674 = vpop.f32.mrb[0].mxu0
  %v1675 = vadd.f32 %v223, %v1674
  %1676 = vmatprep.mubr.bf16.mxu0 %v449
  %1677 = vmatmul.mubr.bf16.gmra.mrb[0].mxu0 %v448
  %v1678 = vpop.f32.mrb[0].mxu0
  %v1679 = vadd.f32 %v219, %v1678
  %v1680 = vpop.f32.mrb[0].mxu0
  %v1681 = vadd.f32 %v223, %v1680
  %v1682 = vpop.f32.mrb[0].mxu0
  %v1683 = vadd.f32 %v219, %v1682
  %v1684 = vpop.f32.mrb[0].mxu0
  %v1685 = vadd.f32 %v223, %v1684
  %1686 = vmatprep.mubr.bf16.mxu0 %v453
  %1687 = vmatmul.mubr.bf16.gmra.mrb[0].mxu0 %v452
  %v1688 = vpop.f32.mrb[0].mxu0
  %v1689 = vadd.f32 %v219, %v1688
  %v1690 = vpop.f32.mrb[0].mxu0
  %v1691 = vadd.f32 %v223, %v1690
  %v1692 = vpop.f32.mrb[0].mxu0
  %v1693 = vadd.f32 %v219, %v1692
  %v1694 = vpop.f32.mrb[0].mxu0
  %v1695 = vadd.f32 %v223, %v1694
  %1696 = vmatprep.mubr.bf16.mxu0 %v457
  %1697 = vmatmul.mubr.bf16.gmra.mrb[0].mxu0 %v456
  %v1698 = vpop.f32.mrb[0].mxu0
  %v1699 = vadd.f32 %v219, %v1698
  %v1700 = vpop.f32.mrb[0].mxu0
  %v1701 = vadd.f32 %v223, %v1700
  %v1702 = vpop.f32.mrb[0].mxu0
  %v1703 = vadd.f32 %v219, %v1702
  %v1704 = vpop.f32.mrb[0].mxu0
  %v1705 = vadd.f32 %v223, %v1704
  %1706 = vmatprep.mubr.bf16.mxu0 %v461
  %1707 = vmatmul.mubr.bf16.gmra.mrb[0].mxu0 %v460
  %v1708 = vpop.f32.mrb[0].mxu0
  %v1709 = vadd.f32 %v219, %v1708
  %v1710 = vpop.f32.mrb[0].mxu0
  %v1711 = vadd.f32 %v223, %v1710
  %v1712 = vpop.f32.mrb[0].mxu0
  %v1713 = vadd.f32 %v219, %v1712
  %v1714 = vpop.f32.mrb[0].mxu0
  %v1715 = vadd.f32 %v223, %v1714
  %1716 = vmatprep.mubr.bf16.mxu0 %v465
  %1717 = vmatmul.mubr.bf16.gmra.mrb[0].mxu0 %v464
  %v1718 = vpop.f32.mrb[0].mxu0
  %v1719 = vadd.f32 %v219, %v1718
  %v1720 = vpop.f32.mrb[0].mxu0
  %v1721 = vadd.f32 %v223, %v1720
  %v1722 = vpop.f32.mrb[0].mxu0
  %v1723 = vadd.f32 %v219, %v1722
  %v1724 = vpop.f32.mrb[0].mxu0
  %v1725 = vadd.f32 %v223, %v1724
  %1726 = vmatprep.mubr.bf16.mxu0 %v469
  %1727 = vmatmul.mubr.bf16.gmra.mrb[0].mxu0 %v468
  %v1728 = vpop.f32.mrb[0].mxu0
  %v1729 = vadd.f32 %v219, %v1728
  %v1730 = vpop.f32.mrb[0].mxu0
  %v1731 = vadd.f32 %v223, %v1730
  %v1732 = vpop.f32.mrb[0].mxu0
  %v1733 = vadd.f32 %v219, %v1732
  %v1734 = vpop.f32.mrb[0].mxu0
  %v1735 = vadd.f32 %v223, %v1734
  %1736 = vmatprep.mubr.bf16.mxu0 %v473
  %1737 = vmatmul.mubr.bf16.gmra.mrb[0].mxu0 %v472
  %v1738 = vpop.f32.mrb[0].mxu0
  %v1739 = vadd.f32 %v219, %v1738
  %v1740 = vpop.f32.mrb[0].mxu0
  %v1741 = vadd.f32 %v223, %v1740
  %v1742 = vpop.f32.mrb[0].mxu0
  %v1743 = vadd.f32 %v219, %v1742
  %v1744 = vpop.f32.mrb[0].mxu0
  %v1745 = vadd.f32 %v223, %v1744
  %1746 = vmatprep.mubr.bf16.mxu0 %v477
  %1747 = vmatmul.mubr.bf16.gmra.mrb[0].mxu0 %v476
  %v1748 = vpop.f32.mrb[0].mxu0
  %v1749 = vadd.f32 %v219, %v1748
  %v1750 = vpop.f32.mrb[0].mxu0
  %v1751 = vadd.f32 %v223, %v1750
  %v1752 = vpop.f32.mrb[0].mxu0
  %v1753 = vadd.f32 %v219, %v1752
  %v1754 = vpop.f32.mrb[0].mxu0
  %v1755 = vadd.f32 %v223, %v1754
  %1756 = vmatprep.mubr.bf16.mxu0 %v481
  %1757 = vmatmul.mubr.bf16.gmra.mrb[0].mxu0 %v480
  %v1758 = vpop.f32.mrb[0].mxu0
  %v1759 = vadd.f32 %v219, %v1758
  %v1760 = vpop.f32.mrb[0].mxu0
  %v1761 = vadd.f32 %v223, %v1760
  %v1762 = vpop.f32.mrb[0].mxu0
  %v1763 = vadd.f32 %v219, %v1762
  %v1764 = vpop.f32.mrb[0].mxu0
  %v1765 = vadd.f32 %v223, %v1764
  %1766 = vdwg.mxu0
  %1767 = vmatprep.subr.bf16.mxu0 %v999
  %1768 = vmatpush1.bf16.msra.mxu0 %v998
  %1769 = vmatprep.subr.bf16.mxu0 %v1003
  %1770 = vmatpush1.bf16.msra.mxu0 %v1002
  %1771 = vmatprep.subr.bf16.mxu0 %v1007
  %1772 = vmatpush1.bf16.msra.mxu0 %v1006
  %1773 = vmatprep.subr.bf16.mxu0 %v1011
  %1774 = vmatpush1.bf16.msra.mxu0 %v1010
  %1775 = vmatprep.subr.bf16.mxu0 %v1015
  %1776 = vmatpush1.bf16.msra.mxu0 %v1014
  %1777 = vmatprep.subr.bf16.mxu0 %v1019
  %1778 = vmatpush1.bf16.msra.mxu0 %v1018
  %1779 = vmatprep.subr.bf16.mxu0 %v1023
  %1780 = vmatpush1.bf16.msra.mxu0 %v1022
  %1781 = vmatprep.subr.bf16.mxu0 %v1027
  %1782 = vmatpush1.bf16.msra.mxu0 %v1026
  %1783 = vmatprep.subr.bf16.mxu0 %v1031
  %1784 = vmatpush1.bf16.msra.mxu0 %v1030
  %1785 = vmatprep.subr.bf16.mxu0 %v1035
  %1786 = vmatpush1.bf16.msra.mxu0 %v1034
  %1787 = vmatprep.subr.bf16.mxu0 %v1039
  %1788 = vmatpush1.bf16.msra.mxu0 %v1038
  %1789 = vmatprep.subr.bf16.mxu0 %v1043
  %1790 = vmatpush1.bf16.msra.mxu0 %v1042
  %1791 = vmatprep.subr.bf16.mxu0 %v1047
  %1792 = vmatpush1.bf16.msra.mxu0 %v1046
  %1793 = vmatprep.subr.bf16.mxu0 %v1051
  %1794 = vmatpush1.bf16.msra.mxu0 %v1050
  %1795 = vmatprep.subr.bf16.mxu0 %v1055
  %1796 = vmatpush1.bf16.msra.mxu0 %v1054
  %1797 = vmatprep.subr.bf16.mxu0 %v1059
  %1798 = vmatpush1.bf16.msra.mxu0 %v1058
  %1799 = vmatprep.mubr.bf16.mxu0 %v423
  %1800 = vmatmul.mubr.bf16.gmra.mrb[0].mxu0 %v422
  %v1801 = vpop.f32.mrb[0].mxu0
  %v1802 = vadd.f32 %v1609, %v1801
  %v1803 = vpop.f32.mrb[0].mxu0
  %v1804 = vadd.f32 %v1611, %v1803
  %v1805 = vpop.f32.mrb[0].mxu0
  %v1806 = vadd.f32 %v1613, %v1805
  %v1807 = vpop.f32.mrb[0].mxu0
  %v1808 = vadd.f32 %v1615, %v1807
  %1809 = vmatprep.mubr.bf16.mxu0 %v427
  %1810 = vmatmul.mubr.bf16.gmra.mrb[0].mxu0 %v426
  %v1811 = vpop.f32.mrb[0].mxu0
  %v1812 = vadd.f32 %v1619, %v1811
  %v1813 = vpop.f32.mrb[0].mxu0
  %v1814 = vadd.f32 %v1621, %v1813
  %v1815 = vpop.f32.mrb[0].mxu0
  %v1816 = vadd.f32 %v1623, %v1815
  %v1817 = vpop.f32.mrb[0].mxu0
  %v1818 = vadd.f32 %v1625, %v1817
  %1819 = vmatprep.mubr.bf16.mxu0 %v431
  %1820 = vmatmul.mubr.bf16.gmra.mrb[0].mxu0 %v430
  %v1821 = vpop.f32.mrb[0].mxu0
  %v1822 = vadd.f32 %v1629, %v1821
  %v1823 = vpop.f32.mrb[0].mxu0
  %v1824 = vadd.f32 %v1631, %v1823
  %v1825 = vpop.f32.mrb[0].mxu0
  %v1826 = vadd.f32 %v1633, %v1825
  %v1827 = vpop.f32.mrb[0].mxu0
  %v1828 = vadd.f32 %v1635, %v1827
  %1829 = vmatprep.mubr.bf16.mxu0 %v435
  %1830 = vmatmul.mubr.bf16.gmra.mrb[0].mxu0 %v434
  %v1831 = vpop.f32.mrb[0].mxu0
  %v1832 = vadd.f32 %v1639, %v1831
  %v1833 = vpop.f32.mrb[0].mxu0
  %v1834 = vadd.f32 %v1641, %v1833
  %v1835 = vpop.f32.mrb[0].mxu0
  %v1836 = vadd.f32 %v1643, %v1835
  %v1837 = vpop.f32.mrb[0].mxu0
  %v1838 = vadd.f32 %v1645, %v1837
  %1839 = vmatprep.mubr.bf16.mxu0 %v439
  %1840 = vmatmul.mubr.bf16.gmra.mrb[0].mxu0 %v438
  %v1841 = vpop.f32.mrb[0].mxu0
  %v1842 = vadd.f32 %v1649, %v1841
  %v1843 = vpop.f32.mrb[0].mxu0
  %v1844 = vadd.f32 %v1651, %v1843
  %v1845 = vpop.f32.mrb[0].mxu0
  %v1846 = vadd.f32 %v1653, %v1845
  %v1847 = vpop.f32.mrb[0].mxu0
  %v1848 = vadd.f32 %v1655, %v1847
  %1849 = vmatprep.mubr.bf16.mxu0 %v443
  %1850 = vmatmul.mubr.bf16.gmra.mrb[0].mxu0 %v442
  %v1851 = vpop.f32.mrb[0].mxu0
  %v1852 = vadd.f32 %v1659, %v1851
  %v1853 = vpop.f32.mrb[0].mxu0
  %v1854 = vadd.f32 %v1661, %v1853
  %v1855 = vpop.f32.mrb[0].mxu0
  %v1856 = vadd.f32 %v1663, %v1855
  %v1857 = vpop.f32.mrb[0].mxu0
  %v1858 = vadd.f32 %v1665, %v1857
  %1859 = vmatprep.mubr.bf16.mxu0 %v447
  %1860 = vmatmul.mubr.bf16.gmra.mrb[0].mxu0 %v446
  %v1861 = vpop.f32.mrb[0].mxu0
  %v1862 = vadd.f32 %v1669, %v1861
  %v1863 = vpop.f32.mrb[0].mxu0
  %v1864 = vadd.f32 %v1671, %v1863
  %v1865 = vpop.f32.mrb[0].mxu0
  %v1866 = vadd.f32 %v1673, %v1865
  %v1867 = vpop.f32.mrb[0].mxu0
  %v1868 = vadd.f32 %v1675, %v1867
  %1869 = vmatprep.mubr.bf16.mxu0 %v451
  %1870 = vmatmul.mubr.bf16.gmra.mrb[0].mxu0 %v450
  %v1871 = vpop.f32.mrb[0].mxu0
  %v1872 = vadd.f32 %v1679, %v1871
  %v1873 = vpop.f32.mrb[0].mxu0
  %v1874 = vadd.f32 %v1681, %v1873
  %v1875 = vpop.f32.mrb[0].mxu0
  %v1876 = vadd.f32 %v1683, %v1875
  %v1877 = vpop.f32.mrb[0].mxu0
  %v1878 = vadd.f32 %v1685, %v1877
  %1879 = vmatprep.mubr.bf16.mxu0 %v455
  %1880 = vmatmul.mubr.bf16.gmra.mrb[0].mxu0 %v454
  %v1881 = vpop.f32.mrb[0].mxu0
  %v1882 = vadd.f32 %v1689, %v1881
  %v1883 = vpop.f32.mrb[0].mxu0
  %v1884 = vadd.f32 %v1691, %v1883
  %v1885 = vpop.f32.mrb[0].mxu0
  %v1886 = vadd.f32 %v1693, %v1885
  %v1887 = vpop.f32.mrb[0].mxu0
  %v1888 = vadd.f32 %v1695, %v1887
  %1889 = vmatprep.mubr.bf16.mxu0 %v459
  %1890 = vmatmul.mubr.bf16.gmra.mrb[0].mxu0 %v458
  %v1891 = vpop.f32.mrb[0].mxu0
  %v1892 = vadd.f32 %v1699, %v1891
  %v1893 = vpop.f32.mrb[0].mxu0
  %v1894 = vadd.f32 %v1701, %v1893
  %v1895 = vpop.f32.mrb[0].mxu0
  %v1896 = vadd.f32 %v1703, %v1895
  %v1897 = vpop.f32.mrb[0].mxu0
  %v1898 = vadd.f32 %v1705, %v1897
  %1899 = vmatprep.mubr.bf16.mxu0 %v463
  %1900 = vmatmul.mubr.bf16.gmra.mrb[0].mxu0 %v462
  %v1901 = vpop.f32.mrb[0].mxu0
  %v1902 = vadd.f32 %v1709, %v1901
  %v1903 = vpop.f32.mrb[0].mxu0
  %v1904 = vadd.f32 %v1711, %v1903
  %v1905 = vpop.f32.mrb[0].mxu0
  %v1906 = vadd.f32 %v1713, %v1905
  %v1907 = vpop.f32.mrb[0].mxu0
  %v1908 = vadd.f32 %v1715, %v1907
  %1909 = vmatprep.mubr.bf16.mxu0 %v467
  %1910 = vmatmul.mubr.bf16.gmra.mrb[0].mxu0 %v466
  %v1911 = vpop.f32.mrb[0].mxu0
  %v1912 = vadd.f32 %v1719, %v1911
  %v1913 = vpop.f32.mrb[0].mxu0
  %v1914 = vadd.f32 %v1721, %v1913
  %v1915 = vpop.f32.mrb[0].mxu0
  %v1916 = vadd.f32 %v1723, %v1915
  %v1917 = vpop.f32.mrb[0].mxu0
  %v1918 = vadd.f32 %v1725, %v1917
  %1919 = vmatprep.mubr.bf16.mxu0 %v471
  %1920 = vmatmul.mubr.bf16.gmra.mrb[0].mxu0 %v470
  %v1921 = vpop.f32.mrb[0].mxu0
  %v1922 = vadd.f32 %v1729, %v1921
  %v1923 = vpop.f32.mrb[0].mxu0
  %v1924 = vadd.f32 %v1731, %v1923
  %v1925 = vpop.f32.mrb[0].mxu0
  %v1926 = vadd.f32 %v1733, %v1925
  %v1927 = vpop.f32.mrb[0].mxu0
  %v1928 = vadd.f32 %v1735, %v1927
  %1929 = vmatprep.mubr.bf16.mxu0 %v475
  %1930 = vmatmul.mubr.bf16.gmra.mrb[0].mxu0 %v474
  %v1931 = vpop.f32.mrb[0].mxu0
  %v1932 = vadd.f32 %v1739, %v1931
  %v1933 = vpop.f32.mrb[0].mxu0
  %v1934 = vadd.f32 %v1741, %v1933
  %v1935 = vpop.f32.mrb[0].mxu0
  %v1936 = vadd.f32 %v1743, %v1935
  %v1937 = vpop.f32.mrb[0].mxu0
  %v1938 = vadd.f32 %v1745, %v1937
  %1939 = vmatprep.mubr.bf16.mxu0 %v479
  %1940 = vmatmul.mubr.bf16.gmra.mrb[0].mxu0 %v478
  %v1941 = vpop.f32.mrb[0].mxu0
  %v1942 = vadd.f32 %v1749, %v1941
  %v1943 = vpop.f32.mrb[0].mxu0
  %v1944 = vadd.f32 %v1751, %v1943
  %v1945 = vpop.f32.mrb[0].mxu0
  %v1946 = vadd.f32 %v1753, %v1945
  %v1947 = vpop.f32.mrb[0].mxu0
  %v1948 = vadd.f32 %v1755, %v1947
  %1949 = vmatprep.mubr.bf16.mxu0 %v483
  %1950 = vmatmul.mubr.bf16.gmra.mrb[0].mxu0 %v482
  %v1951 = vpop.f32.mrb[0].mxu0
  %v1952 = vadd.f32 %v1759, %v1951
  %v1953 = vpop.f32.mrb[0].mxu0
  %v1954 = vadd.f32 %v1761, %v1953
  %v1955 = vpop.f32.mrb[0].mxu0
  %v1956 = vadd.f32 %v1763, %v1955
  %v1957 = vpop.f32.mrb[0].mxu0
  %v1958 = vadd.f32 %v1765, %v1957
  %1959 = vdwg.mxu0
  %v1960 = vpack.c.bf16 %v1420, %v1416
  %v1961 = vpack.c.bf16 %v1422, %v1418
  %v1962 = vpack.c.bf16 %v1806, %v1802
  %v1963 = vpack.c.bf16 %v1808, %v1804
  %v1964 = vpack.c.bf16 %v1430, %v1426
  %v1965 = vpack.c.bf16 %v1432, %v1428
  %v1966 = vpack.c.bf16 %v1816, %v1812
  %v1967 = vpack.c.bf16 %v1818, %v1814
  %v1968 = vpack.c.bf16 %v1440, %v1436
  %v1969 = vpack.c.bf16 %v1442, %v1438
  %v1970 = vpack.c.bf16 %v1826, %v1822
  %v1971 = vpack.c.bf16 %v1828, %v1824
  %v1972 = vpack.c.bf16 %v1450, %v1446
  %v1973 = vpack.c.bf16 %v1452, %v1448
  %v1974 = vpack.c.bf16 %v1836, %v1832
  %v1975 = vpack.c.bf16 %v1838, %v1834
  %v1976 = vpack.c.bf16 %v1460, %v1456
  %v1977 = vpack.c.bf16 %v1462, %v1458
  %v1978 = vpack.c.bf16 %v1846, %v1842
  %v1979 = vpack.c.bf16 %v1848, %v1844
  %v1980 = vpack.c.bf16 %v1470, %v1466
  %v1981 = vpack.c.bf16 %v1472, %v1468
  %v1982 = vpack.c.bf16 %v1856, %v1852
  %v1983 = vpack.c.bf16 %v1858, %v1854
  %v1984 = vpack.c.bf16 %v1480, %v1476
  %v1985 = vpack.c.bf16 %v1482, %v1478
  %v1986 = vpack.c.bf16 %v1866, %v1862
  %v1987 = vpack.c.bf16 %v1868, %v1864
  %v1988 = vpack.c.bf16 %v1490, %v1486
  %v1989 = vpack.c.bf16 %v1492, %v1488
  %v1990 = vpack.c.bf16 %v1876, %v1872
  %v1991 = vpack.c.bf16 %v1878, %v1874
  %v1992 = vpack.c.bf16 %v1500, %v1496
  %v1993 = vpack.c.bf16 %v1502, %v1498
  %v1994 = vpack.c.bf16 %v1886, %v1882
  %v1995 = vpack.c.bf16 %v1888, %v1884
  %v1996 = vpack.c.bf16 %v1510, %v1506
  %v1997 = vpack.c.bf16 %v1512, %v1508
  %v1998 = vpack.c.bf16 %v1896, %v1892
  %v1999 = vpack.c.bf16 %v1898, %v1894
  %v2000 = vpack.c.bf16 %v1520, %v1516
  %v2001 = vpack.c.bf16 %v1522, %v1518
  %v2002 = vpack.c.bf16 %v1906, %v1902
  %v2003 = vpack.c.bf16 %v1908, %v1904
  %v2004 = vpack.c.bf16 %v1530, %v1526
  %v2005 = vpack.c.bf16 %v1532, %v1528
  %v2006 = vpack.c.bf16 %v1916, %v1912
  %v2007 = vpack.c.bf16 %v1918, %v1914
  %v2008 = vpack.c.bf16 %v1540, %v1536
  %v2009 = vpack.c.bf16 %v1542, %v1538
  %v2010 = vpack.c.bf16 %v1926, %v1922
  %v2011 = vpack.c.bf16 %v1928, %v1924
  %v2012 = vpack.c.bf16 %v1550, %v1546
  %v2013 = vpack.c.bf16 %v1552, %v1548
  %v2014 = vpack.c.bf16 %v1936, %v1932
  %v2015 = vpack.c.bf16 %v1938, %v1934
  %v2016 = vpack.c.bf16 %v1560, %v1556
  %v2017 = vpack.c.bf16 %v1562, %v1558
  %v2018 = vpack.c.bf16 %v1946, %v1942
  %v2019 = vpack.c.bf16 %v1948, %v1944
  %v2020 = vpack.c.bf16 %v1570, %v1566
  %v2021 = vpack.c.bf16 %v1572, %v1568
  %v2022 = vpack.c.bf16 %v1956, %v1952
  %v2023 = vpack.c.bf16 %v1958, %v1954
  %v2088 = vunpack.c.l.b16 %v1960
  %v2089 = vunpack.c.l.b16 %v1961
  %v2090 = vunpack.c.l.b16 %v1962
  %v2091 = vunpack.c.l.b16 %v1963
  %v2092 = vunpack.c.h.b16 %v1960
  %v2093 = vunpack.c.h.b16 %v1961
  %v2094 = vunpack.c.h.b16 %v1962
  %v2095 = vunpack.c.h.b16 %v1963
  %v2096 = vunpack.c.l.b16 %v1964
  %v2097 = vunpack.c.l.b16 %v1965
  %v2098 = vunpack.c.l.b16 %v1966
  %v2099 = vunpack.c.l.b16 %v1967
  %v2100 = vunpack.c.h.b16 %v1964
  %v2101 = vunpack.c.h.b16 %v1965
  %v2102 = vunpack.c.h.b16 %v1966
  %v2103 = vunpack.c.h.b16 %v1967
  %v2104 = vunpack.c.l.b16 %v1968
  %v2105 = vunpack.c.l.b16 %v1969
  %v2106 = vunpack.c.l.b16 %v1970
  %v2107 = vunpack.c.l.b16 %v1971
  %v2108 = vunpack.c.h.b16 %v1968
  %v2109 = vunpack.c.h.b16 %v1969
  %v2110 = vunpack.c.h.b16 %v1970
  %v2111 = vunpack.c.h.b16 %v1971
  %v2112 = vunpack.c.l.b16 %v1972
  %v2113 = vunpack.c.l.b16 %v1973
  %v2114 = vunpack.c.l.b16 %v1974
  %v2115 = vunpack.c.l.b16 %v1975
  %v2116 = vunpack.c.h.b16 %v1972
  %v2117 = vunpack.c.h.b16 %v1973
  %v2118 = vunpack.c.h.b16 %v1974
  %v2119 = vunpack.c.h.b16 %v1975
  %v2120 = vunpack.c.l.b16 %v1976
  %v2121 = vunpack.c.l.b16 %v1977
  %v2122 = vunpack.c.l.b16 %v1978
  %v2123 = vunpack.c.l.b16 %v1979
  %v2124 = vunpack.c.h.b16 %v1976
  %v2125 = vunpack.c.h.b16 %v1977
  %v2126 = vunpack.c.h.b16 %v1978
  %v2127 = vunpack.c.h.b16 %v1979
  %v2128 = vunpack.c.l.b16 %v1980
  %v2129 = vunpack.c.l.b16 %v1981
  %v2130 = vunpack.c.l.b16 %v1982
  %v2131 = vunpack.c.l.b16 %v1983
  %v2132 = vunpack.c.h.b16 %v1980
  %v2133 = vunpack.c.h.b16 %v1981
  %v2134 = vunpack.c.h.b16 %v1982
  %v2135 = vunpack.c.h.b16 %v1983
  %v2136 = vunpack.c.l.b16 %v1984
  %v2137 = vunpack.c.l.b16 %v1985
  %v2138 = vunpack.c.l.b16 %v1986
  %v2139 = vunpack.c.l.b16 %v1987
  %v2140 = vunpack.c.h.b16 %v1984
  %v2141 = vunpack.c.h.b16 %v1985
  %v2142 = vunpack.c.h.b16 %v1986
  %v2143 = vunpack.c.h.b16 %v1987
  %v2144 = vunpack.c.l.b16 %v1988
  %v2145 = vunpack.c.l.b16 %v1989
  %v2146 = vunpack.c.l.b16 %v1990
  %v2147 = vunpack.c.l.b16 %v1991
  %v2148 = vunpack.c.h.b16 %v1988
  %v2149 = vunpack.c.h.b16 %v1989
  %v2150 = vunpack.c.h.b16 %v1990
  %v2151 = vunpack.c.h.b16 %v1991
  %v2152 = vunpack.c.l.b16 %v1992
  %v2153 = vunpack.c.l.b16 %v1993
  %v2154 = vunpack.c.l.b16 %v1994
  %v2155 = vunpack.c.l.b16 %v1995
  %v2156 = vunpack.c.h.b16 %v1992
  %v2157 = vunpack.c.h.b16 %v1993
  %v2158 = vunpack.c.h.b16 %v1994
  %v2159 = vunpack.c.h.b16 %v1995
  %v2160 = vunpack.c.l.b16 %v1996
  %v2161 = vunpack.c.l.b16 %v1997
  %v2162 = vunpack.c.l.b16 %v1998
  %v2163 = vunpack.c.l.b16 %v1999
  %v2164 = vunpack.c.h.b16 %v1996
  %v2165 = vunpack.c.h.b16 %v1997
  %v2166 = vunpack.c.h.b16 %v1998
  %v2167 = vunpack.c.h.b16 %v1999
  %v2168 = vunpack.c.l.b16 %v2000
  %v2169 = vunpack.c.l.b16 %v2001
  %v2170 = vunpack.c.l.b16 %v2002
  %v2171 = vunpack.c.l.b16 %v2003
  %v2172 = vunpack.c.h.b16 %v2000
  %v2173 = vunpack.c.h.b16 %v2001
  %v2174 = vunpack.c.h.b16 %v2002
  %v2175 = vunpack.c.h.b16 %v2003
  %v2176 = vunpack.c.l.b16 %v2004
  %v2177 = vunpack.c.l.b16 %v2005
  %v2178 = vunpack.c.l.b16 %v2006
  %v2179 = vunpack.c.l.b16 %v2007
  %v2180 = vunpack.c.h.b16 %v2004
  %v2181 = vunpack.c.h.b16 %v2005
  %v2182 = vunpack.c.h.b16 %v2006
  %v2183 = vunpack.c.h.b16 %v2007
  %v2184 = vunpack.c.l.b16 %v2008
  %v2185 = vunpack.c.l.b16 %v2009
  %v2186 = vunpack.c.l.b16 %v2010
  %v2187 = vunpack.c.l.b16 %v2011
  %v2188 = vunpack.c.h.b16 %v2008
  %v2189 = vunpack.c.h.b16 %v2009
  %v2190 = vunpack.c.h.b16 %v2010
  %v2191 = vunpack.c.h.b16 %v2011
  %v2192 = vunpack.c.l.b16 %v2012
  %v2193 = vunpack.c.l.b16 %v2013
  %v2194 = vunpack.c.l.b16 %v2014
  %v2195 = vunpack.c.l.b16 %v2015
  %v2196 = vunpack.c.h.b16 %v2012
  %v2197 = vunpack.c.h.b16 %v2013
  %v2198 = vunpack.c.h.b16 %v2014
  %v2199 = vunpack.c.h.b16 %v2015
  %v2200 = vunpack.c.l.b16 %v2016
  %v2201 = vunpack.c.l.b16 %v2017
  %v2202 = vunpack.c.l.b16 %v2018
  %v2203 = vunpack.c.l.b16 %v2019
  %v2204 = vunpack.c.h.b16 %v2016
  %v2205 = vunpack.c.h.b16 %v2017
  %v2206 = vunpack.c.h.b16 %v2018
  %v2207 = vunpack.c.h.b16 %v2019
  %v2208 = vunpack.c.l.b16 %v2020
  %v2209 = vunpack.c.l.b16 %v2021
  %v2210 = vunpack.c.l.b16 %v2022
  %v2211 = vunpack.c.l.b16 %v2023
  %v2212 = vunpack.c.h.b16 %v2020
  %v2213 = vunpack.c.h.b16 %v2021
  %v2214 = vunpack.c.h.b16 %v2022
  %v2215 = vunpack.c.h.b16 %v2023
  %v2216 = vpack.c.b16 %v2089, %v2088
  %v2217 = vpack.c.b16 %v2091, %v2090
  %v2218 = vpack.c.b16 %v2093, %v2092
  %v2219 = vpack.c.b16 %v2095, %v2094
  %v2220 = vpack.c.b16 %v2097, %v2096
  %v2221 = vpack.c.b16 %v2099, %v2098
  %v2222 = vpack.c.b16 %v2101, %v2100
  %v2223 = vpack.c.b16 %v2103, %v2102
  %v2224 = vpack.c.b16 %v2105, %v2104
  %v2225 = vpack.c.b16 %v2107, %v2106
  %v2226 = vpack.c.b16 %v2109, %v2108
  %v2227 = vpack.c.b16 %v2111, %v2110
  %v2228 = vpack.c.b16 %v2113, %v2112
  %v2229 = vpack.c.b16 %v2115, %v2114
  %v2230 = vpack.c.b16 %v2117, %v2116
  %v2231 = vpack.c.b16 %v2119, %v2118
  %v2232 = vpack.c.b16 %v2121, %v2120
  %v2233 = vpack.c.b16 %v2123, %v2122
  %v2234 = vpack.c.b16 %v2125, %v2124
  %v2235 = vpack.c.b16 %v2127, %v2126
  %v2236 = vpack.c.b16 %v2129, %v2128
  %v2237 = vpack.c.b16 %v2131, %v2130
  %v2238 = vpack.c.b16 %v2133, %v2132
  %v2239 = vpack.c.b16 %v2135, %v2134
  %v2240 = vpack.c.b16 %v2137, %v2136
  %v2241 = vpack.c.b16 %v2139, %v2138
  %v2242 = vpack.c.b16 %v2141, %v2140
  %v2243 = vpack.c.b16 %v2143, %v2142
  %v2244 = vpack.c.b16 %v2145, %v2144
  %v2245 = vpack.c.b16 %v2147, %v2146
  %v2246 = vpack.c.b16 %v2149, %v2148
  %v2247 = vpack.c.b16 %v2151, %v2150
  %v2248 = vpack.c.b16 %v2153, %v2152
  %v2249 = vpack.c.b16 %v2155, %v2154
  %v2250 = vpack.c.b16 %v2157, %v2156
  %v2251 = vpack.c.b16 %v2159, %v2158
  %v2252 = vpack.c.b16 %v2161, %v2160
  %v2253 = vpack.c.b16 %v2163, %v2162
  %v2254 = vpack.c.b16 %v2165, %v2164
  %v2255 = vpack.c.b16 %v2167, %v2166
  %v2256 = vpack.c.b16 %v2169, %v2168
  %v2257 = vpack.c.b16 %v2171, %v2170
  %v2258 = vpack.c.b16 %v2173, %v2172
  %v2259 = vpack.c.b16 %v2175, %v2174
  %v2260 = vpack.c.b16 %v2177, %v2176
  %v2261 = vpack.c.b16 %v2179, %v2178
  %v2262 = vpack.c.b16 %v2181, %v2180
  %v2263 = vpack.c.b16 %v2183, %v2182
  %v2264 = vpack.c.b16 %v2185, %v2184
  %v2265 = vpack.c.b16 %v2187, %v2186
  %v2266 = vpack.c.b16 %v2189, %v2188
  %v2267 = vpack.c.b16 %v2191, %v2190
  %v2268 = vpack.c.b16 %v2193, %v2192
  %v2269 = vpack.c.b16 %v2195, %v2194
  %v2270 = vpack.c.b16 %v2197, %v2196
  %v2271 = vpack.c.b16 %v2199, %v2198
  %v2272 = vpack.c.b16 %v2201, %v2200
  %v2273 = vpack.c.b16 %v2203, %v2202
  %v2274 = vpack.c.b16 %v2205, %v2204
  %v2275 = vpack.c.b16 %v2207, %v2206
  %v2276 = vpack.c.b16 %v2209, %v2208
  %v2277 = vpack.c.b16 %v2211, %v2210
  %v2278 = vpack.c.b16 %v2213, %v2212
  %v2279 = vpack.c.b16 %v2215, %v2214
  %2344 = vst [vmem:[%s3] sm:$0xff] %v2216
  %2345 = vst [vmem:[%s3 + $0x8] sm:$0xff] %v2217
  %2346 = vst [vmem:[%s3 + $0x10] sm:$0xff] %v2218
  %2347 = vst [vmem:[%s3 + $0x18] sm:$0xff] %v2219
  %2348 = vst [vmem:[%s3 + $0x20] sm:$0xff] %v2220
  %2349 = vst [vmem:[%s3 + $0x28] sm:$0xff] %v2221
  %2350 = vst [vmem:[%s3 + $0x30] sm:$0xff] %v2222
  %2351 = vst [vmem:[%s3 + $0x38] sm:$0xff] %v2223
  %2352 = vst [vmem:[%s3 + $0x40] sm:$0xff] %v2224
  %2353 = vst [vmem:[%s3 + $0x48] sm:$0xff] %v2225
  %2354 = vst [vmem:[%s3 + $0x50] sm:$0xff] %v2226
  %2355 = vst [vmem:[%s3 + $0x58] sm:$0xff] %v2227
  %2356 = vst [vmem:[%s3 + $0x60] sm:$0xff] %v2228
  %2357 = vst [vmem:[%s3 + $0x68] sm:$0xff] %v2229
  %2358 = vst [vmem:[%s3 + $0x70] sm:$0xff] %v2230
  %2359 = vst [vmem:[%s3 + $0x78] sm:$0xff] %v2231
  %2360 = vst [vmem:[%s3 + $0x80] sm:$0xff] %v2232
  %2361 = vst [vmem:[%s3 + $0x88] sm:$0xff] %v2233
  %2362 = vst [vmem:[%s3 + $0x90] sm:$0xff] %v2234
  %2363 = vst [vmem:[%s3 + $0x98] sm:$0xff] %v2235
  %2364 = vst [vmem:[%s3 + $0xa0] sm:$0xff] %v2236
  %2365 = vst [vmem:[%s3 + $0xa8] sm:$0xff] %v2237
  %2366 = vst [vmem:[%s3 + $0xb0] sm:$0xff] %v2238
  %2367 = vst [vmem:[%s3 + $0xb8] sm:$0xff] %v2239
  %2368 = vst [vmem:[%s3 + $0xc0] sm:$0xff] %v2240
  %2369 = vst [vmem:[%s3 + $0xc8] sm:$0xff] %v2241
  %2370 = vst [vmem:[%s3 + $0xd0] sm:$0xff] %v2242
  %2371 = vst [vmem:[%s3 + $0xd8] sm:$0xff] %v2243
  %2372 = vst [vmem:[%s3 + $0xe0] sm:$0xff] %v2244
  %2373 = vst [vmem:[%s3 + $0xe8] sm:$0xff] %v2245
  %2374 = vst [vmem:[%s3 + $0xf0] sm:$0xff] %v2246
  %2375 = vst [vmem:[%s3 + $0xf8] sm:$0xff] %v2247
  %2376 = vst [vmem:[%s3 + $0x100] sm:$0xff] %v2248
  %2377 = vst [vmem:[%s3 + $0x108] sm:$0xff] %v2249
  %2378 = vst [vmem:[%s3 + $0x110] sm:$0xff] %v2250
  %2379 = vst [vmem:[%s3 + $0x118] sm:$0xff] %v2251
  %2380 = vst [vmem:[%s3 + $0x120] sm:$0xff] %v2252
  %2381 = vst [vmem:[%s3 + $0x128] sm:$0xff] %v2253
  %2382 = vst [vmem:[%s3 + $0x130] sm:$0xff] %v2254
  %2383 = vst [vmem:[%s3 + $0x138] sm:$0xff] %v2255
  %2384 = vst [vmem:[%s3 + $0x140] sm:$0xff] %v2256
  %2385 = vst [vmem:[%s3 + $0x148] sm:$0xff] %v2257
  %2386 = vst [vmem:[%s3 + $0x150] sm:$0xff] %v2258
  %2387 = vst [vmem:[%s3 + $0x158] sm:$0xff] %v2259
  %2388 = vst [vmem:[%s3 + $0x160] sm:$0xff] %v2260
  %2389 = vst [vmem:[%s3 + $0x168] sm:$0xff] %v2261
  %2390 = vst [vmem:[%s3 + $0x170] sm:$0xff] %v2262
  %2391 = vst [vmem:[%s3 + $0x178] sm:$0xff] %v2263
  %2392 = vst [vmem:[%s3 + $0x180] sm:$0xff] %v2264
  %2393 = vst [vmem:[%s3 + $0x188] sm:$0xff] %v2265
  %2394 = vst [vmem:[%s3 + $0x190] sm:$0xff] %v2266
  %2395 = vst [vmem:[%s3 + $0x198] sm:$0xff] %v2267
  %2396 = vst [vmem:[%s3 + $0x1a0] sm:$0xff] %v2268
  %2397 = vst [vmem:[%s3 + $0x1a8] sm:$0xff] %v2269
  %2398 = vst [vmem:[%s3 + $0x1b0] sm:$0xff] %v2270
  %2399 = vst [vmem:[%s3 + $0x1b8] sm:$0xff] %v2271
  %2400 = vst [vmem:[%s3 + $0x1c0] sm:$0xff] %v2272
  %2401 = vst [vmem:[%s3 + $0x1c8] sm:$0xff] %v2273
  %2402 = vst [vmem:[%s3 + $0x1d0] sm:$0xff] %v2274
  %2403 = vst [vmem:[%s3 + $0x1d8] sm:$0xff] %v2275
  %2404 = vst [vmem:[%s3 + $0x1e0] sm:$0xff] %v2276
  %2405 = vst [vmem:[%s3 + $0x1e8] sm:$0xff] %v2277
  %2406 = vst [vmem:[%s3 + $0x1f0] sm:$0xff] %v2278
  %2407 = vst [vmem:[%s3 + $0x1f8] sm:$0xff] %v2279
  // Predicated region
  $region14: #{distillation_model_forward.2} parent=0 // pred_check
    _
  $region15: #{distillation_model_forward.2} parent=0 // pred_check_branch
    %2409 = sbr.rel (0) target = $region17
  $region16: #{distillation_model_forward.2} parent=0 // pred_region
    _
  $region17: #{distillation_model_forward.2} parent=0 // pred_fallthru
    _
  // Predicated region
  $region18: #{distillation_model_forward.2} parent=0 // pred_check
    _
  $region19: #{distillation_model_forward.2} parent=0 // pred_check_branch
    %2411 = sbr.rel (0) target = $region21
  $region20: #{distillation_model_forward.2} parent=0 // pred_region
    _
  $region21: #{distillation_model_forward.2} parent=0 // pred_fallthru
    _

</llo_original>
